<compile_context>
chip_gen: v5e
topology: v5e:2x2
jax: 0.10.0
libtpu: 0.0.40
codegen_flags: <defaults>
</compile_context>

<pallas_src>
import math
import jax
import jax.numpy as jnp
from jax import lax
from jax.experimental import pallas as pl
from jax.experimental.pallas import tpu as pltpu

# ---------------- configuration ----------------
BSZ = 2
NUM_HEAD = 2
HEAD_DIM = 32
SEQ_LEN = 64
WINDOW = 16                        # window_size
NUM_LANDMARKS = 8
DIM = NUM_HEAD * HEAD_DIM          # transformer_dim (64)
EXT = max(WINDOW // 2, 1)          # ext_len in get_tiles_v2
HL = NUM_HEAD * NUM_LANDMARKS
PROJ_OUT = 3 * DIM + HL            # fused [Wq | Wk | Wv | dconv_fc] width (208)
JOINT = NUM_LANDMARKS + SEQ_LEN    # joint [landmark | window] score width (72)
LN_EPS = 1e-5
NEG_INF = -1e30                    # finite "-inf": NaN-safe under exp()
QSCALE = 1.0 / math.sqrt(HEAD_DIM)

# MXU operand dtype.  Set to jnp.bfloat16 on v6e/v7x for ~2-3x MXU throughput
# (accumulation stays f32 via preferred_element_type); default f32 keeps exact
# parity with the reference float32 PyTorch module.
MXU_DTYPE = jnp.float32


def _mm(a, b, dn=None):
    """Matmul on the MXU with f32 accumulation and an operand-dtype knob."""
    a = a.astype(MXU_DTYPE)
    b = b.astype(MXU_DTYPE)
    if dn is None:
        return jnp.dot(a, b, preferred_element_type=jnp.float32)
    return lax.dot_general(a, b, dn, preferred_element_type=jnp.float32)


# ---------------- single fused kernel (grid over batch) ----------------
def attention_sketch_kernel(x_ref, jneg_ref, mq_ref,
                            w_ref, b_ref, gl_ref, bl_ref, gs_ref, bs_ref,
                            wo_ref, wob_ref, o_ref):
    x = x_ref[0]            # (S, DIM)
    jneg = jneg_ref[0]      # (S, L+S) additive mask: 0 on landmark cols,
                            #   0 / NEG_INF on (band & key-padding) window cols
    mq = mq_ref[0]          # (S, 1)   1.0 = valid query/row, 0.0 = padded

    # ---- fused [W_q | W_k | W_v | dconv_fc] projection + dual_ln_l ------------
    y = _mm(x, w_ref[...]) + b_ref[...]                       # (S, 3*DIM + H*L)

    def ln(t, g, b):
        mu = jnp.mean(t, axis=-1, keepdims=True)
        var = jnp.mean((t - mu) ** 2, axis=-1, keepdims=True)
        return (t - mu) * lax.rsqrt(var + LN_EPS) * g + b

    q = y[:, :DIM] * QSCALE                                    # scaled queries
    k = ln(y[:, DIM:2 * DIM], gl_ref[...], bl_ref[...])        # dual_ln_l (shared)
    v = ln(y[:, 2 * DIM:3 * DIM], gl_ref[...], bl_ref[...])

    # ---- landmark scores: mask padded rows, softmax over the sequence axis ----
    hs = y[:, 3 * DIM:] + (mq - 1.0) * 1e30                    # (S, H*L)
    hs = jnp.exp(hs - jnp.max(hs, axis=0, keepdims=True))
    hs = hs * (1.0 / jnp.sum(hs, axis=0, keepdims=True))       # exact softmax

    # ---- per-head landmark compression (contract the sequence axis) -----------
    dn_seq = (((0,), (0,)), ((), ()))                          # hs_h^T @ k_h
    kc, vc = [], []
    for h in range(NUM_HEAD):
        hs_h = hs[:, h * NUM_LANDMARKS:(h + 1) * NUM_LANDMARKS]        # (S, L)
        hd = slice(h * HEAD_DIM, (h + 1) * HEAD_DIM)
        kc.append(_mm(hs_h, k[:, hd], dn_seq))                          # (L, Dh)
        vc.append(_mm(hs_h, v[:, hd], dn_seq))                          # (L, Dh)

    # ---- shared dual_ln_s over the combined head dim (split statistics,
    #      no lane concat needed) ------------------------------------------------
    def ln_split(parts, g, b):
        mu = sum(jnp.sum(p, axis=-1, keepdims=True) for p in parts) / DIM
        var = sum(jnp.sum((p - mu) ** 2, axis=-1, keepdims=True) for p in parts) / DIM
        inv = lax.rsqrt(var + LN_EPS)
        return [(parts[h] - mu) * inv * g[:, h * HEAD_DIM:(h + 1) * HEAD_DIM]
                + b[:, h * HEAD_DIM:(h + 1) * HEAD_DIM] for h in range(NUM_HEAD)]

    kc = ln_split(kc, gs_ref[...], bs_ref[...])
    vc = ln_split(vc, gs_ref[...], bs_ref[...])

    # ---- joint [landmark | window] attention + fused W_o, per head ------------
    # TODO(synk): for large SEQ_LEN the dense (S, S) window block should become a
    # banded (S, W+2*EXT) layout before scaling S (VMEM on v7x).
    dn_t = (((1,), (1,)), ((), ()))                            # A @ B^T
    out = jnp.zeros((SEQ_LEN, DIM), jnp.float32)
    for h in range(NUM_HEAD):
        hd = slice(h * HEAD_DIM, (h + 1) * HEAD_DIM)
        kj = jnp.concatenate([kc[h], k[:, hd]], axis=0)        # (L+S, Dh) sublane stack
        vj = jnp.concatenate([vc[h], v[:, hd]], axis=0)        # (L+S, Dh)
        s = _mm(q[:, hd], kj, dn_t) + jneg                     # (S, L+S), masked
        e = jnp.exp(s - jnp.max(s, axis=-1, keepdims=True))
        p = e * (1.0 / jnp.sum(e, axis=-1, keepdims=True))     # exact softmax
        c_h = _mm(p, vj) * mq                                  # (S, Dh), padded queries -> 0
        out = out + _mm(c_h, wo_ref[hd, :])                    # chunked W_o, no lane concat
    o_ref[0] = out + wob_ref[...]


@jax.jit
def attention_sketch_forward(params, X, mask):
    b = X.shape[0]
    mask_f = mask.astype(jnp.float32)
    mq = mask_f.reshape(b, SEQ_LEN, 1)

    # Static band mask reproducing get_tiles_v2 / get_tiled_mask_v2 semantics:
    # query i (group g = i // W) attends keys in [g*W - EXT, g*W + W + EXT).
    # It is constant-folded by XLA; here it is pre-combined with per-batch key
    # padding and padded with zero landmark columns so the kernel applies a
    # single additive mask (no per-grid-step iota/compare work).
    row = jnp.arange(SEQ_LEN)[:, None]
    col = jnp.arange(SEQ_LEN)[None, :]
    gstart = (row // WINDOW) * WINDOW
    in_band = (col >= gstart - EXT) & (col < gstart + WINDOW + EXT)     # (S, S)
    win_ok = in_band[None, :, :] & (mask_f[:, None, :] > 0.5)           # (B, S, S)
    joint_neg = jnp.concatenate(
        [jnp.zeros((b, SEQ_LEN, NUM_LANDMARKS), jnp.float32),
         jnp.where(win_ok, 0.0, NEG_INF)], axis=-1)                     # (B, S, L+S)

    const2 = lambda i: (0, 0)
    # TODO(synk): on v7x, pltpu.CORE_PARALLEL on the batch axis (or a core_map
    # mesh) would pin the two batch elements to the two TensorCores.
    return pl.pallas_call(
        attention_sketch_kernel,
        out_shape=jax.ShapeDtypeStruct((b, SEQ_LEN, DIM), jnp.float32),
        grid=(b,),
        in_specs=[
            pl.BlockSpec((1, SEQ_LEN, DIM), lambda i: (i, 0, 0)),       # X
            pl.BlockSpec((1, SEQ_LEN, JOINT), lambda i: (i, 0, 0)),     # joint additive mask
            pl.BlockSpec((1, SEQ_LEN, 1), lambda i: (i, 0, 0)),         # query-valid mask
            pl.BlockSpec((DIM, PROJ_OUT), const2),                      # fused proj weights
            pl.BlockSpec((1, PROJ_OUT), const2),                        # fused proj bias
            pl.BlockSpec((1, DIM), const2),                             # dual_ln_l gamma
            pl.BlockSpec((1, DIM), const2),                             # dual_ln_l beta
            pl.BlockSpec((1, DIM), const2),                             # dual_ln_s gamma
            pl.BlockSpec((1, DIM), const2),                             # dual_ln_s beta
            pl.BlockSpec((DIM, DIM), const2),                           # W_o weight
            pl.BlockSpec((1, DIM), const2),                             # W_o bias
        ],
        out_specs=pl.BlockSpec((1, SEQ_LEN, DIM), lambda i: (i, 0, 0)),
        compiler_params=pltpu.CompilerParams(dimension_semantics=("parallel",)),
    )(X, joint_neg, mq, params['w_all'], params['b_all'],
      params['ln_l_g'], params['ln_l_b'], params['ln_s_g'], params['ln_s_b'],
      params['wo_w'], params['wo_b'])


# ---------------- deterministic parameter init ----------------
def init_params(key):
    ks = jax.random.split(key, 10)

    def lin_w(k, din, dout):
        return jax.random.normal(k, (din, dout), jnp.float32) * (1.0 / math.sqrt(din))

    def lin_b(k, dout):
        return jax.random.normal(k, (1, dout), jnp.float32) * 0.01

    wq_w, wq_b = lin_w(ks[0], DIM, DIM), lin_b(ks[1], DIM)
    wk_w, wk_b = lin_w(ks[2], DIM, DIM), lin_b(ks[3], DIM)
    wv_w, wv_b = lin_w(ks[4], DIM, DIM), lin_b(ks[5], DIM)
    dc_w, dc_b = lin_w(ks[8], DIM, HL), lin_b(ks[9], HL)

    return {
        # fused [W_q | W_k | W_v | dconv_fc] (weights stored transposed vs PyTorch)
        'w_all': jnp.concatenate([wq_w, wk_w, wv_w, dc_w], axis=1),     # (DIM, PROJ_OUT)
        'b_all': jnp.concatenate([wq_b, wk_b, wv_b, dc_b], axis=1),     # (1, PROJ_OUT)
        'wo_w': lin_w(ks[6], DIM, DIM), 'wo_b': lin_b(ks[7], DIM),
        # LayerNorm params: PyTorch default init (weight=1, bias=0); dual_ln_l is
        # shared by K/V and dual_ln_s by Kc/Vc, matching the reference module.
        'ln_l_g': jnp.ones((1, DIM), jnp.float32), 'ln_l_b': jnp.zeros((1, DIM), jnp.float32),
        'ln_s_g': jnp.ones((1, DIM), jnp.float32), 'ln_s_b': jnp.zeros((1, DIM), jnp.float32),
    }


if __name__ == "__main__":
    key = jax.random.PRNGKey(0)
    kx, kp = jax.random.split(key)
    params = init_params(kp)

    X = jax.random.normal(kx, (BSZ, SEQ_LEN, DIM), jnp.float32)
    lengths = jnp.array([SEQ_LEN, SEQ_LEN - WINDOW], dtype=jnp.int32)
    mask = (jnp.arange(SEQ_LEN)[None, :] < lengths[:, None]).astype(jnp.float32)

    # TODO(synk): cls-token path and dynamic-conv branch are disabled by config
    # (pooling_mode='mean', conv_kernel_size=-1); attention dropout p=0 is identity.
    out = attention_sketch_forward(params, X, mask)
    jax.block_until_ready(out)
    assert out.shape == (BSZ, SEQ_LEN, DIM)
    print("KERNEL_OK")
</pallas_src>

<mosaic_0001>
module attributes {stable_mosaic.version = 11 : i64} {
  func.func @attention_sketch_kernel(%arg0: i32, %arg1: memref<1x64x64xf32, #tpu.memory_space<vmem>>, %arg2: memref<1x64x72xf32, #tpu.memory_space<vmem>>, %arg3: memref<1x64x1xf32, #tpu.memory_space<vmem>>, %arg4: memref<64x208xf32, #tpu.memory_space<vmem>>, %arg5: memref<1x208xf32, #tpu.memory_space<vmem>>, %arg6: memref<1x64xf32, #tpu.memory_space<vmem>>, %arg7: memref<1x64xf32, #tpu.memory_space<vmem>>, %arg8: memref<1x64xf32, #tpu.memory_space<vmem>>, %arg9: memref<1x64xf32, #tpu.memory_space<vmem>>, %arg10: memref<64x64xf32, #tpu.memory_space<vmem>>, %arg11: memref<1x64xf32, #tpu.memory_space<vmem>>, %arg12: memref<1x64x64xf32, #tpu.memory_space<vmem>>) attributes {dimension_semantics = [#tpu.dimension_semantics<parallel>], iteration_bounds = array<i64: 2>, scalar_prefetch = 0 : i64, scratch_operands = 0 : i64, tpu.core_type = #tpu.core_type<tc>, window_params = [{transform_indices = @transform_0, window_bounds = array<i64: 1, 64, 64>}, {transform_indices = @transform_1, window_bounds = array<i64: 1, 64, 72>}, {transform_indices = @transform_2, window_bounds = array<i64: 1, 64, 1>}, {pipeline_mode = #tpu.pipeline_mode<synchronous>, transform_indices = @transform_3, window_bounds = array<i64: 64, 208>}, {pipeline_mode = #tpu.pipeline_mode<synchronous>, transform_indices = @transform_4, window_bounds = array<i64: 1, 208>}, {pipeline_mode = #tpu.pipeline_mode<synchronous>, transform_indices = @transform_5, window_bounds = array<i64: 1, 64>}, {pipeline_mode = #tpu.pipeline_mode<synchronous>, transform_indices = @transform_6, window_bounds = array<i64: 1, 64>}, {pipeline_mode = #tpu.pipeline_mode<synchronous>, transform_indices = @transform_7, window_bounds = array<i64: 1, 64>}, {pipeline_mode = #tpu.pipeline_mode<synchronous>, transform_indices = @transform_8, window_bounds = array<i64: 1, 64>}, {pipeline_mode = #tpu.pipeline_mode<synchronous>, transform_indices = @transform_9, window_bounds = array<i64: 64, 64>}, {pipeline_mode = #tpu.pipeline_mode<synchronous>, transform_indices = @transform_10, window_bounds = array<i64: 1, 64>}, {transform_indices = @transform_11, window_bounds = array<i64: 1, 64, 64>}]} {
    %c0 = arith.constant 0 : index
    %c0_0 = arith.constant 0 : index
    %c0_1 = arith.constant 0 : index
    %0 = vector.load %arg1[%c0, %c0_0, %c0_1] : memref<1x64x64xf32, #tpu.memory_space<vmem>>, vector<1x64x64xf32>
    %1 = vector.shape_cast %0 : vector<1x64x64xf32> to vector<64x64xf32>
    %c0_2 = arith.constant 0 : index
    %c0_3 = arith.constant 0 : index
    %c0_4 = arith.constant 0 : index
    %2 = vector.load %arg2[%c0_2, %c0_3, %c0_4] : memref<1x64x72xf32, #tpu.memory_space<vmem>>, vector<1x64x72xf32>
    %3 = vector.shape_cast %2 : vector<1x64x72xf32> to vector<64x72xf32>
    %c0_5 = arith.constant 0 : index
    %c0_6 = arith.constant 0 : index
    %c0_7 = arith.constant 0 : index
    %4 = vector.load %arg3[%c0_5, %c0_6, %c0_7] : memref<1x64x1xf32, #tpu.memory_space<vmem>>, vector<1x64x1xf32>
    %5 = vector.shape_cast %4 : vector<1x64x1xf32> to vector<64x1xf32>
    %c0_8 = arith.constant 0 : index
    %c0_9 = arith.constant 0 : index
    %6 = vector.load %arg4[%c0_8, %c0_9] : memref<64x208xf32, #tpu.memory_space<vmem>>, vector<64x208xf32>
    %cst = arith.constant dense<0.000000e+00> : vector<64x208xf32>
    %7 = tpu.matmul %1, %6, %cst {dimension_numbers = #tpu.dot_dimension_numbers<[1], [0], [0], [1], [0, 0, 1, 1], [], []>} : vector<64x64xf32>, vector<64x208xf32>, vector<64x208xf32> -> vector<64x208xf32>
    %c0_10 = arith.constant 0 : index
    %c0_11 = arith.constant 0 : index
    %8 = vector.load %arg5[%c0_10, %c0_11] : memref<1x208xf32, #tpu.memory_space<vmem>>, vector<1x208xf32>
    %9 = vector.broadcast %8 : vector<1x208xf32> to vector<64x208xf32>
    %10 = arith.addf %7, %9 : vector<64x208xf32>
    %11 = vector.extract_strided_slice %10 {offsets = [0, 0], sizes = [64, 64], strides = [1, 1]} : vector<64x208xf32> to vector<64x64xf32>
    %cst_12 = arith.constant 0.176776692 : f32
    %12 = vector.broadcast %cst_12 : f32 to vector<64x64xf32>
    %13 = arith.mulf %11, %12 : vector<64x64xf32>
    %14 = vector.extract_strided_slice %10 {offsets = [0, 64], sizes = [64, 64], strides = [1, 1]} : vector<64x208xf32> to vector<64x64xf32>
    %c0_13 = arith.constant 0 : index
    %c0_14 = arith.constant 0 : index
    %15 = vector.load %arg6[%c0_13, %c0_14] : memref<1x64xf32, #tpu.memory_space<vmem>>, vector<1x64xf32>
    %c0_15 = arith.constant 0 : index
    %c0_16 = arith.constant 0 : index
    %16 = vector.load %arg7[%c0_15, %c0_16] : memref<1x64xf32, #tpu.memory_space<vmem>>, vector<1x64xf32>
    %cst_17 = arith.constant dense<0.000000e+00> : vector<64xf32>
    %17 = vector.multi_reduction <add>, %14, %cst_17 [1] : vector<64x64xf32> to vector<64xf32>
    %18 = vector.shape_cast %17 : vector<64xf32> to vector<64x1xf32>
    %cst_18 = arith.constant 6.400000e+01 : f32
    %19 = vector.broadcast %cst_18 : f32 to vector<64x1xf32>
    %20 = arith.divf %18, %19 : vector<64x1xf32>
    %21 = vector.broadcast %20 : vector<64x1xf32> to vector<64x64xf32>
    %22 = arith.subf %14, %21 : vector<64x64xf32>
    %23 = arith.mulf %22, %22 : vector<64x64xf32>
    %cst_19 = arith.constant dense<0.000000e+00> : vector<64xf32>
    %24 = vector.multi_reduction <add>, %23, %cst_19 [1] : vector<64x64xf32> to vector<64xf32>
    %25 = vector.shape_cast %24 : vector<64xf32> to vector<64x1xf32>
    %cst_20 = arith.constant 6.400000e+01 : f32
    %26 = vector.broadcast %cst_20 : f32 to vector<64x1xf32>
    %27 = arith.divf %25, %26 : vector<64x1xf32>
    %28 = vector.broadcast %20 : vector<64x1xf32> to vector<64x64xf32>
    %29 = arith.subf %14, %28 : vector<64x64xf32>
    %cst_21 = arith.constant 9.99999974E-6 : f32
    %30 = vector.broadcast %cst_21 : f32 to vector<64x1xf32>
    %31 = arith.addf %27, %30 : vector<64x1xf32>
    %32 = math.rsqrt %31 : vector<64x1xf32>
    %33 = vector.broadcast %32 : vector<64x1xf32> to vector<64x64xf32>
    %34 = arith.mulf %29, %33 : vector<64x64xf32>
    %35 = vector.broadcast %15 : vector<1x64xf32> to vector<64x64xf32>
    %36 = arith.mulf %34, %35 : vector<64x64xf32>
    %37 = vector.broadcast %16 : vector<1x64xf32> to vector<64x64xf32>
    %38 = arith.addf %36, %37 : vector<64x64xf32>
    %39 = vector.extract_strided_slice %10 {offsets = [0, 128], sizes = [64, 64], strides = [1, 1]} : vector<64x208xf32> to vector<64x64xf32>
    %c0_22 = arith.constant 0 : index
    %c0_23 = arith.constant 0 : index
    %40 = vector.load %arg6[%c0_22, %c0_23] : memref<1x64xf32, #tpu.memory_space<vmem>>, vector<1x64xf32>
    %c0_24 = arith.constant 0 : index
    %c0_25 = arith.constant 0 : index
    %41 = vector.load %arg7[%c0_24, %c0_25] : memref<1x64xf32, #tpu.memory_space<vmem>>, vector<1x64xf32>
    %cst_26 = arith.constant dense<0.000000e+00> : vector<64xf32>
    %42 = vector.multi_reduction <add>, %39, %cst_26 [1] : vector<64x64xf32> to vector<64xf32>
    %43 = vector.shape_cast %42 : vector<64xf32> to vector<64x1xf32>
    %cst_27 = arith.constant 6.400000e+01 : f32
    %44 = vector.broadcast %cst_27 : f32 to vector<64x1xf32>
    %45 = arith.divf %43, %44 : vector<64x1xf32>
    %46 = vector.broadcast %45 : vector<64x1xf32> to vector<64x64xf32>
    %47 = arith.subf %39, %46 : vector<64x64xf32>
    %48 = arith.mulf %47, %47 : vector<64x64xf32>
    %cst_28 = arith.constant dense<0.000000e+00> : vector<64xf32>
    %49 = vector.multi_reduction <add>, %48, %cst_28 [1] : vector<64x64xf32> to vector<64xf32>
    %50 = vector.shape_cast %49 : vector<64xf32> to vector<64x1xf32>
    %cst_29 = arith.constant 6.400000e+01 : f32
    %51 = vector.broadcast %cst_29 : f32 to vector<64x1xf32>
    %52 = arith.divf %50, %51 : vector<64x1xf32>
    %53 = vector.broadcast %45 : vector<64x1xf32> to vector<64x64xf32>
    %54 = arith.subf %39, %53 : vector<64x64xf32>
    %cst_30 = arith.constant 9.99999974E-6 : f32
    %55 = vector.broadcast %cst_30 : f32 to vector<64x1xf32>
    %56 = arith.addf %52, %55 : vector<64x1xf32>
    %57 = math.rsqrt %56 : vector<64x1xf32>
    %58 = vector.broadcast %57 : vector<64x1xf32> to vector<64x64xf32>
    %59 = arith.mulf %54, %58 : vector<64x64xf32>
    %60 = vector.broadcast %40 : vector<1x64xf32> to vector<64x64xf32>
    %61 = arith.mulf %59, %60 : vector<64x64xf32>
    %62 = vector.broadcast %41 : vector<1x64xf32> to vector<64x64xf32>
    %63 = arith.addf %61, %62 : vector<64x64xf32>
    %64 = vector.extract_strided_slice %10 {offsets = [0, 192], sizes = [64, 16], strides = [1, 1]} : vector<64x208xf32> to vector<64x16xf32>
    %cst_31 = arith.constant 1.000000e+00 : f32
    %65 = vector.broadcast %cst_31 : f32 to vector<64x1xf32>
    %66 = arith.subf %5, %65 : vector<64x1xf32>
    %cst_32 = arith.constant 1.000000e+30 : f32
    %67 = vector.broadcast %cst_32 : f32 to vector<64x1xf32>
    %68 = arith.mulf %66, %67 : vector<64x1xf32>
    %69 = vector.broadcast %68 : vector<64x1xf32> to vector<64x16xf32>
    %70 = arith.addf %64, %69 : vector<64x16xf32>
    %cst_33 = arith.constant dense<0xFF800000> : vector<16xf32>
    %71 = vector.multi_reduction <maximumf>, %70, %cst_33 [0] : vector<64x16xf32> to vector<16xf32>
    %72 = vector.shape_cast %71 : vector<16xf32> to vector<1x16xf32>
    %73 = vector.broadcast %72 : vector<1x16xf32> to vector<64x16xf32>
    %74 = arith.subf %70, %73 : vector<64x16xf32>
    %75 = math.exp %74 : vector<64x16xf32>
    %cst_34 = arith.constant dense<0.000000e+00> : vector<16xf32>
    %76 = vector.multi_reduction <add>, %75, %cst_34 [0] : vector<64x16xf32> to vector<16xf32>
    %77 = vector.shape_cast %76 : vector<16xf32> to vector<1x16xf32>
    %cst_35 = arith.constant 1.000000e+00 : f32
    %78 = vector.broadcast %cst_35 : f32 to vector<1x16xf32>
    %79 = arith.divf %78, %77 : vector<1x16xf32>
    %80 = vector.broadcast %79 : vector<1x16xf32> to vector<64x16xf32>
    %81 = arith.mulf %75, %80 : vector<64x16xf32>
    %82 = vector.extract_strided_slice %81 {offsets = [0, 0], sizes = [64, 8], strides = [1, 1]} : vector<64x16xf32> to vector<64x8xf32>
    %83 = vector.extract_strided_slice %38 {offsets = [0, 0], sizes = [64, 32], strides = [1, 1]} : vector<64x64xf32> to vector<64x32xf32>
    %cst_36 = arith.constant dense<0.000000e+00> : vector<8x32xf32>
    %84 = tpu.matmul %82, %83, %cst_36 {dimension_numbers = #tpu.dot_dimension_numbers<[0], [0], [1], [1], [0, 1, 1, 1], [], []>} : vector<64x8xf32>, vector<64x32xf32>, vector<8x32xf32> -> vector<8x32xf32>
    %85 = vector.extract_strided_slice %63 {offsets = [0, 0], sizes = [64, 32], strides = [1, 1]} : vector<64x64xf32> to vector<64x32xf32>
    %cst_37 = arith.constant dense<0.000000e+00> : vector<8x32xf32>
    %86 = tpu.matmul %82, %85, %cst_37 {dimension_numbers = #tpu.dot_dimension_numbers<[0], [0], [1], [1], [0, 1, 1, 1], [], []>} : vector<64x8xf32>, vector<64x32xf32>, vector<8x32xf32> -> vector<8x32xf32>
    %87 = vector.extract_strided_slice %81 {offsets = [0, 8], sizes = [64, 8], strides = [1, 1]} : vector<64x16xf32> to vector<64x8xf32>
    %88 = vector.extract_strided_slice %38 {offsets = [0, 32], sizes = [64, 32], strides = [1, 1]} : vector<64x64xf32> to vector<64x32xf32>
    %cst_38 = arith.constant dense<0.000000e+00> : vector<8x32xf32>
    %89 = tpu.matmul %87, %88, %cst_38 {dimension_numbers = #tpu.dot_dimension_numbers<[0], [0], [1], [1], [0, 1, 1, 1], [], []>} : vector<64x8xf32>, vector<64x32xf32>, vector<8x32xf32> -> vector<8x32xf32>
    %90 = vector.extract_strided_slice %63 {offsets = [0, 32], sizes = [64, 32], strides = [1, 1]} : vector<64x64xf32> to vector<64x32xf32>
    %cst_39 = arith.constant dense<0.000000e+00> : vector<8x32xf32>
    %91 = tpu.matmul %87, %90, %cst_39 {dimension_numbers = #tpu.dot_dimension_numbers<[0], [0], [1], [1], [0, 1, 1, 1], [], []>} : vector<64x8xf32>, vector<64x32xf32>, vector<8x32xf32> -> vector<8x32xf32>
    %c0_40 = arith.constant 0 : index
    %c0_41 = arith.constant 0 : index
    %92 = vector.load %arg8[%c0_40, %c0_41] : memref<1x64xf32, #tpu.memory_space<vmem>>, vector<1x64xf32>
    %c0_42 = arith.constant 0 : index
    %c0_43 = arith.constant 0 : index
    %93 = vector.load %arg9[%c0_42, %c0_43] : memref<1x64xf32, #tpu.memory_space<vmem>>, vector<1x64xf32>
    %cst_44 = arith.constant dense<0.000000e+00> : vector<8xf32>
    %94 = vector.multi_reduction <add>, %84, %cst_44 [1] : vector<8x32xf32> to vector<8xf32>
    %95 = vector.shape_cast %94 : vector<8xf32> to vector<8x1xf32>
    %cst_45 = arith.constant 0.000000e+00 : f32
    %96 = vector.broadcast %cst_45 : f32 to vector<8x1xf32>
    %97 = arith.addf %96, %95 : vector<8x1xf32>
    %cst_46 = arith.constant dense<0.000000e+00> : vector<8xf32>
    %98 = vector.multi_reduction <add>, %89, %cst_46 [1] : vector<8x32xf32> to vector<8xf32>
    %99 = vector.shape_cast %98 : vector<8xf32> to vector<8x1xf32>
    %100 = arith.addf %97, %99 : vector<8x1xf32>
    %cst_47 = arith.constant 6.400000e+01 : f32
    %101 = vector.broadcast %cst_47 : f32 to vector<8x1xf32>
    %102 = arith.divf %100, %101 : vector<8x1xf32>
    %103 = vector.broadcast %102 : vector<8x1xf32> to vector<8x32xf32>
    %104 = arith.subf %84, %103 : vector<8x32xf32>
    %105 = arith.mulf %104, %104 : vector<8x32xf32>
    %cst_48 = arith.constant dense<0.000000e+00> : vector<8xf32>
    %106 = vector.multi_reduction <add>, %105, %cst_48 [1] : vector<8x32xf32> to vector<8xf32>
    %107 = vector.shape_cast %106 : vector<8xf32> to vector<8x1xf32>
    %cst_49 = arith.constant 0.000000e+00 : f32
    %108 = vector.broadcast %cst_49 : f32 to vector<8x1xf32>
    %109 = arith.addf %108, %107 : vector<8x1xf32>
    %110 = vector.broadcast %102 : vector<8x1xf32> to vector<8x32xf32>
    %111 = arith.subf %89, %110 : vector<8x32xf32>
    %112 = arith.mulf %111, %111 : vector<8x32xf32>
    %cst_50 = arith.constant dense<0.000000e+00> : vector<8xf32>
    %113 = vector.multi_reduction <add>, %112, %cst_50 [1] : vector<8x32xf32> to vector<8xf32>
    %114 = vector.shape_cast %113 : vector<8xf32> to vector<8x1xf32>
    %115 = arith.addf %109, %114 : vector<8x1xf32>
    %cst_51 = arith.constant 6.400000e+01 : f32
    %116 = vector.broadcast %cst_51 : f32 to vector<8x1xf32>
    %117 = arith.divf %115, %116 : vector<8x1xf32>
    %cst_52 = arith.constant 9.99999974E-6 : f32
    %118 = vector.broadcast %cst_52 : f32 to vector<8x1xf32>
    %119 = arith.addf %117, %118 : vector<8x1xf32>
    %120 = math.rsqrt %119 : vector<8x1xf32>
    %121 = vector.broadcast %102 : vector<8x1xf32> to vector<8x32xf32>
    %122 = arith.subf %84, %121 : vector<8x32xf32>
    %123 = vector.broadcast %120 : vector<8x1xf32> to vector<8x32xf32>
    %124 = arith.mulf %122, %123 : vector<8x32xf32>
    %125 = vector.extract_strided_slice %92 {offsets = [0, 0], sizes = [1, 32], strides = [1, 1]} : vector<1x64xf32> to vector<1x32xf32>
    %126 = vector.broadcast %125 : vector<1x32xf32> to vector<8x32xf32>
    %127 = arith.mulf %124, %126 : vector<8x32xf32>
    %128 = vector.extract_strided_slice %93 {offsets = [0, 0], sizes = [1, 32], strides = [1, 1]} : vector<1x64xf32> to vector<1x32xf32>
    %129 = vector.broadcast %128 : vector<1x32xf32> to vector<8x32xf32>
    %130 = arith.addf %127, %129 : vector<8x32xf32>
    %131 = vector.broadcast %102 : vector<8x1xf32> to vector<8x32xf32>
    %132 = arith.subf %89, %131 : vector<8x32xf32>
    %133 = vector.broadcast %120 : vector<8x1xf32> to vector<8x32xf32>
    %134 = arith.mulf %132, %133 : vector<8x32xf32>
    %135 = vector.extract_strided_slice %92 {offsets = [0, 32], sizes = [1, 32], strides = [1, 1]} : vector<1x64xf32> to vector<1x32xf32>
    %136 = vector.broadcast %135 : vector<1x32xf32> to vector<8x32xf32>
    %137 = arith.mulf %134, %136 : vector<8x32xf32>
    %138 = vector.extract_strided_slice %93 {offsets = [0, 32], sizes = [1, 32], strides = [1, 1]} : vector<1x64xf32> to vector<1x32xf32>
    %139 = vector.broadcast %138 : vector<1x32xf32> to vector<8x32xf32>
    %140 = arith.addf %137, %139 : vector<8x32xf32>
    %c0_53 = arith.constant 0 : index
    %c0_54 = arith.constant 0 : index
    %141 = vector.load %arg8[%c0_53, %c0_54] : memref<1x64xf32, #tpu.memory_space<vmem>>, vector<1x64xf32>
    %c0_55 = arith.constant 0 : index
    %c0_56 = arith.constant 0 : index
    %142 = vector.load %arg9[%c0_55, %c0_56] : memref<1x64xf32, #tpu.memory_space<vmem>>, vector<1x64xf32>
    %cst_57 = arith.constant dense<0.000000e+00> : vector<8xf32>
    %143 = vector.multi_reduction <add>, %86, %cst_57 [1] : vector<8x32xf32> to vector<8xf32>
    %144 = vector.shape_cast %143 : vector<8xf32> to vector<8x1xf32>
    %cst_58 = arith.constant 0.000000e+00 : f32
    %145 = vector.broadcast %cst_58 : f32 to vector<8x1xf32>
    %146 = arith.addf %145, %144 : vector<8x1xf32>
    %cst_59 = arith.constant dense<0.000000e+00> : vector<8xf32>
    %147 = vector.multi_reduction <add>, %91, %cst_59 [1] : vector<8x32xf32> to vector<8xf32>
    %148 = vector.shape_cast %147 : vector<8xf32> to vector<8x1xf32>
    %149 = arith.addf %146, %148 : vector<8x1xf32>
    %cst_60 = arith.constant 6.400000e+01 : f32
    %150 = vector.broadcast %cst_60 : f32 to vector<8x1xf32>
    %151 = arith.divf %149, %150 : vector<8x1xf32>
    %152 = vector.broadcast %151 : vector<8x1xf32> to vector<8x32xf32>
    %153 = arith.subf %86, %152 : vector<8x32xf32>
    %154 = arith.mulf %153, %153 : vector<8x32xf32>
    %cst_61 = arith.constant dense<0.000000e+00> : vector<8xf32>
    %155 = vector.multi_reduction <add>, %154, %cst_61 [1] : vector<8x32xf32> to vector<8xf32>
    %156 = vector.shape_cast %155 : vector<8xf32> to vector<8x1xf32>
    %cst_62 = arith.constant 0.000000e+00 : f32
    %157 = vector.broadcast %cst_62 : f32 to vector<8x1xf32>
    %158 = arith.addf %157, %156 : vector<8x1xf32>
    %159 = vector.broadcast %151 : vector<8x1xf32> to vector<8x32xf32>
    %160 = arith.subf %91, %159 : vector<8x32xf32>
    %161 = arith.mulf %160, %160 : vector<8x32xf32>
    %cst_63 = arith.constant dense<0.000000e+00> : vector<8xf32>
    %162 = vector.multi_reduction <add>, %161, %cst_63 [1] : vector<8x32xf32> to vector<8xf32>
    %163 = vector.shape_cast %162 : vector<8xf32> to vector<8x1xf32>
    %164 = arith.addf %158, %163 : vector<8x1xf32>
    %cst_64 = arith.constant 6.400000e+01 : f32
    %165 = vector.broadcast %cst_64 : f32 to vector<8x1xf32>
    %166 = arith.divf %164, %165 : vector<8x1xf32>
    %cst_65 = arith.constant 9.99999974E-6 : f32
    %167 = vector.broadcast %cst_65 : f32 to vector<8x1xf32>
    %168 = arith.addf %166, %167 : vector<8x1xf32>
    %169 = math.rsqrt %168 : vector<8x1xf32>
    %170 = vector.broadcast %151 : vector<8x1xf32> to vector<8x32xf32>
    %171 = arith.subf %86, %170 : vector<8x32xf32>
    %172 = vector.broadcast %169 : vector<8x1xf32> to vector<8x32xf32>
    %173 = arith.mulf %171, %172 : vector<8x32xf32>
    %174 = vector.extract_strided_slice %141 {offsets = [0, 0], sizes = [1, 32], strides = [1, 1]} : vector<1x64xf32> to vector<1x32xf32>
    %175 = vector.broadcast %174 : vector<1x32xf32> to vector<8x32xf32>
    %176 = arith.mulf %173, %175 : vector<8x32xf32>
    %177 = vector.extract_strided_slice %142 {offsets = [0, 0], sizes = [1, 32], strides = [1, 1]} : vector<1x64xf32> to vector<1x32xf32>
    %178 = vector.broadcast %177 : vector<1x32xf32> to vector<8x32xf32>
    %179 = arith.addf %176, %178 : vector<8x32xf32>
    %180 = vector.broadcast %151 : vector<8x1xf32> to vector<8x32xf32>
    %181 = arith.subf %91, %180 : vector<8x32xf32>
    %182 = vector.broadcast %169 : vector<8x1xf32> to vector<8x32xf32>
    %183 = arith.mulf %181, %182 : vector<8x32xf32>
    %184 = vector.extract_strided_slice %141 {offsets = [0, 32], sizes = [1, 32], strides = [1, 1]} : vector<1x64xf32> to vector<1x32xf32>
    %185 = vector.broadcast %184 : vector<1x32xf32> to vector<8x32xf32>
    %186 = arith.mulf %183, %185 : vector<8x32xf32>
    %187 = vector.extract_strided_slice %142 {offsets = [0, 32], sizes = [1, 32], strides = [1, 1]} : vector<1x64xf32> to vector<1x32xf32>
    %188 = vector.broadcast %187 : vector<1x32xf32> to vector<8x32xf32>
    %189 = arith.addf %186, %188 : vector<8x32xf32>
    %cst_66 = arith.constant 0.000000e+00 : f32
    %190 = vector.broadcast %cst_66 : f32 to vector<64x64xf32>
    %191 = vector.extract_strided_slice %38 {offsets = [0, 0], sizes = [64, 32], strides = [1, 1]} : vector<64x64xf32> to vector<64x32xf32>
    %192 = tpu.concatenate %130, %191 in 0 : vector<8x32xf32>, vector<64x32xf32> -> vector<72x32xf32>
    %193 = vector.extract_strided_slice %63 {offsets = [0, 0], sizes = [64, 32], strides = [1, 1]} : vector<64x64xf32> to vector<64x32xf32>
    %194 = tpu.concatenate %179, %193 in 0 : vector<8x32xf32>, vector<64x32xf32> -> vector<72x32xf32>
    %195 = vector.extract_strided_slice %13 {offsets = [0, 0], sizes = [64, 32], strides = [1, 1]} : vector<64x64xf32> to vector<64x32xf32>
    %cst_67 = arith.constant dense<0.000000e+00> : vector<64x72xf32>
    %196 = tpu.matmul %195, %192, %cst_67 {dimension_numbers = #tpu.dot_dimension_numbers<[1], [1], [0], [0], [0, 0, 1, 0], [], []>} : vector<64x32xf32>, vector<72x32xf32>, vector<64x72xf32> -> vector<64x72xf32>
    %197 = arith.addf %196, %3 : vector<64x72xf32>
    %cst_68 = arith.constant dense<0xFF800000> : vector<64xf32>
    %198 = vector.multi_reduction <maximumf>, %197, %cst_68 [1] : vector<64x72xf32> to vector<64xf32>
    %199 = vector.shape_cast %198 : vector<64xf32> to vector<64x1xf32>
    %200 = vector.broadcast %199 : vector<64x1xf32> to vector<64x72xf32>
    %201 = arith.subf %197, %200 : vector<64x72xf32>
    %202 = math.exp %201 : vector<64x72xf32>
    %cst_69 = arith.constant dense<0.000000e+00> : vector<64xf32>
    %203 = vector.multi_reduction <add>, %202, %cst_69 [1] : vector<64x72xf32> to vector<64xf32>
    %204 = vector.shape_cast %203 : vector<64xf32> to vector<64x1xf32>
    %cst_70 = arith.constant 1.000000e+00 : f32
    %205 = vector.broadcast %cst_70 : f32 to vector<64x1xf32>
    %206 = arith.divf %205, %204 : vector<64x1xf32>
    %207 = vector.broadcast %206 : vector<64x1xf32> to vector<64x72xf32>
    %208 = arith.mulf %202, %207 : vector<64x72xf32>
    %cst_71 = arith.constant dense<0.000000e+00> : vector<64x32xf32>
    %209 = tpu.matmul %208, %194, %cst_71 {dimension_numbers = #tpu.dot_dimension_numbers<[1], [0], [0], [1], [0, 0, 1, 1], [], []>} : vector<64x72xf32>, vector<72x32xf32>, vector<64x32xf32> -> vector<64x32xf32>
    %210 = vector.broadcast %5 : vector<64x1xf32> to vector<64x32xf32>
    %211 = arith.mulf %209, %210 : vector<64x32xf32>
    %c0_72 = arith.constant 0 : index
    %c0_73 = arith.constant 0 : index
    %212 = vector.load %arg10[%c0_72, %c0_73] : memref<64x64xf32, #tpu.memory_space<vmem>>, vector<32x64xf32>
    %cst_74 = arith.constant dense<0.000000e+00> : vector<64x64xf32>
    %213 = tpu.matmul %211, %212, %cst_74 {dimension_numbers = #tpu.dot_dimension_numbers<[1], [0], [0], [1], [0, 0, 1, 1], [], []>} : vector<64x32xf32>, vector<32x64xf32>, vector<64x64xf32> -> vector<64x64xf32>
    %214 = arith.addf %190, %213 : vector<64x64xf32>
    %215 = vector.extract_strided_slice %38 {offsets = [0, 32], sizes = [64, 32], strides = [1, 1]} : vector<64x64xf32> to vector<64x32xf32>
    %216 = tpu.concatenate %140, %215 in 0 : vector<8x32xf32>, vector<64x32xf32> -> vector<72x32xf32>
    %217 = vector.extract_strided_slice %63 {offsets = [0, 32], sizes = [64, 32], strides = [1, 1]} : vector<64x64xf32> to vector<64x32xf32>
    %218 = tpu.concatenate %189, %217 in 0 : vector<8x32xf32>, vector<64x32xf32> -> vector<72x32xf32>
    %219 = vector.extract_strided_slice %13 {offsets = [0, 32], sizes = [64, 32], strides = [1, 1]} : vector<64x64xf32> to vector<64x32xf32>
    %cst_75 = arith.constant dense<0.000000e+00> : vector<64x72xf32>
    %220 = tpu.matmul %219, %216, %cst_75 {dimension_numbers = #tpu.dot_dimension_numbers<[1], [1], [0], [0], [0, 0, 1, 0], [], []>} : vector<64x32xf32>, vector<72x32xf32>, vector<64x72xf32> -> vector<64x72xf32>
    %221 = arith.addf %220, %3 : vector<64x72xf32>
    %cst_76 = arith.constant dense<0xFF800000> : vector<64xf32>
    %222 = vector.multi_reduction <maximumf>, %221, %cst_76 [1] : vector<64x72xf32> to vector<64xf32>
    %223 = vector.shape_cast %222 : vector<64xf32> to vector<64x1xf32>
    %224 = vector.broadcast %223 : vector<64x1xf32> to vector<64x72xf32>
    %225 = arith.subf %221, %224 : vector<64x72xf32>
    %226 = math.exp %225 : vector<64x72xf32>
    %cst_77 = arith.constant dense<0.000000e+00> : vector<64xf32>
    %227 = vector.multi_reduction <add>, %226, %cst_77 [1] : vector<64x72xf32> to vector<64xf32>
    %228 = vector.shape_cast %227 : vector<64xf32> to vector<64x1xf32>
    %cst_78 = arith.constant 1.000000e+00 : f32
    %229 = vector.broadcast %cst_78 : f32 to vector<64x1xf32>
    %230 = arith.divf %229, %228 : vector<64x1xf32>
    %231 = vector.broadcast %230 : vector<64x1xf32> to vector<64x72xf32>
    %232 = arith.mulf %226, %231 : vector<64x72xf32>
    %cst_79 = arith.constant dense<0.000000e+00> : vector<64x32xf32>
    %233 = tpu.matmul %232, %218, %cst_79 {dimension_numbers = #tpu.dot_dimension_numbers<[1], [0], [0], [1], [0, 0, 1, 1], [], []>} : vector<64x72xf32>, vector<72x32xf32>, vector<64x32xf32> -> vector<64x32xf32>
    %234 = vector.broadcast %5 : vector<64x1xf32> to vector<64x32xf32>
    %235 = arith.mulf %233, %234 : vector<64x32xf32>
    %c32 = arith.constant 32 : index
    %c0_80 = arith.constant 0 : index
    %236 = vector.load %arg10[%c32, %c0_80] : memref<64x64xf32, #tpu.memory_space<vmem>>, vector<32x64xf32>
    %cst_81 = arith.constant dense<0.000000e+00> : vector<64x64xf32>
    %237 = tpu.matmul %235, %236, %cst_81 {dimension_numbers = #tpu.dot_dimension_numbers<[1], [0], [0], [1], [0, 0, 1, 1], [], []>} : vector<64x32xf32>, vector<32x64xf32>, vector<64x64xf32> -> vector<64x64xf32>
    %238 = arith.addf %214, %237 : vector<64x64xf32>
    %c0_82 = arith.constant 0 : index
    %c0_83 = arith.constant 0 : index
    %239 = vector.load %arg11[%c0_82, %c0_83] : memref<1x64xf32, #tpu.memory_space<vmem>>, vector<1x64xf32>
    %240 = vector.broadcast %239 : vector<1x64xf32> to vector<64x64xf32>
    %241 = arith.addf %238, %240 : vector<64x64xf32>
    %c0_84 = arith.constant 0 : index
    %c0_85 = arith.constant 0 : index
    %c0_86 = arith.constant 0 : index
    %242 = vector.load %arg12[%c0_84, %c0_85, %c0_86] : memref<1x64x64xf32, #tpu.memory_space<vmem>>, vector<1x64x64xf32>
    %243 = vector.shape_cast %242 : vector<1x64x64xf32> to vector<64x64xf32>
    %244 = vector.shape_cast %241 : vector<64x64xf32> to vector<1x64x64xf32>
    tpu.vector_store %arg12[%c0_84, %c0_85, %c0_86], %244 {strides = array<i32>} : memref<1x64x64xf32, #tpu.memory_space<vmem>>, vector<1x64x64xf32>,
    return
  }
  func.func @transform_0(%arg0: i32) -> (i32, i32, i32) {
    %c0_i32 = arith.constant 0 : i32
    %c0_i32_0 = arith.constant 0 : i32
    %c0_i32_1 = arith.constant 0 : i32
    return %arg0, %c0_i32, %c0_i32_0 : i32, i32, i32
  }
  func.func @transform_1(%arg0: i32) -> (i32, i32, i32) {
    %c0_i32 = arith.constant 0 : i32
    %c0_i32_0 = arith.constant 0 : i32
    %c0_i32_1 = arith.constant 0 : i32
    return %arg0, %c0_i32, %c0_i32_0 : i32, i32, i32
  }
  func.func @transform_2(%arg0: i32) -> (i32, i32, i32) {
    %c0_i32 = arith.constant 0 : i32
    %c0_i32_0 = arith.constant 0 : i32
    %c0_i32_1 = arith.constant 0 : i32
    return %arg0, %c0_i32, %c0_i32_0 : i32, i32, i32
  }
  func.func @transform_3(%arg0: i32) -> (i32, i32) {
    %c0_i32 = arith.constant 0 : i32
    %c0_i32_0 = arith.constant 0 : i32
    %c0_i32_1 = arith.constant 0 : i32
    return %c0_i32, %c0_i32_0 : i32, i32
  }
  func.func @transform_4(%arg0: i32) -> (i32, i32) {
    %c0_i32 = arith.constant 0 : i32
    %c0_i32_0 = arith.constant 0 : i32
    %c0_i32_1 = arith.constant 0 : i32
    return %c0_i32, %c0_i32_0 : i32, i32
  }
  func.func @transform_5(%arg0: i32) -> (i32, i32) {
    %c0_i32 = arith.constant 0 : i32
    %c0_i32_0 = arith.constant 0 : i32
    %c0_i32_1 = arith.constant 0 : i32
    return %c0_i32, %c0_i32_0 : i32, i32
  }
  func.func @transform_6(%arg0: i32) -> (i32, i32) {
    %c0_i32 = arith.constant 0 : i32
    %c0_i32_0 = arith.constant 0 : i32
    %c0_i32_1 = arith.constant 0 : i32
    return %c0_i32, %c0_i32_0 : i32, i32
  }
  func.func @transform_7(%arg0: i32) -> (i32, i32) {
    %c0_i32 = arith.constant 0 : i32
    %c0_i32_0 = arith.constant 0 : i32
    %c0_i32_1 = arith.constant 0 : i32
    return %c0_i32, %c0_i32_0 : i32, i32
  }
  func.func @transform_8(%arg0: i32) -> (i32, i32) {
    %c0_i32 = arith.constant 0 : i32
    %c0_i32_0 = arith.constant 0 : i32
    %c0_i32_1 = arith.constant 0 : i32
    return %c0_i32, %c0_i32_0 : i32, i32
  }
  func.func @transform_9(%arg0: i32) -> (i32, i32) {
    %c0_i32 = arith.constant 0 : i32
    %c0_i32_0 = arith.constant 0 : i32
    %c0_i32_1 = arith.constant 0 : i32
    return %c0_i32, %c0_i32_0 : i32, i32
  }
  func.func @transform_10(%arg0: i32) -> (i32, i32) {
    %c0_i32 = arith.constant 0 : i32
    %c0_i32_0 = arith.constant 0 : i32
    %c0_i32_1 = arith.constant 0 : i32
    return %c0_i32, %c0_i32_0 : i32, i32
  }
  func.func @transform_11(%arg0: i32) -> (i32, i32, i32) {
    %c0_i32 = arith.constant 0 : i32
    %c0_i32_0 = arith.constant 0 : i32
    %c0_i32_1 = arith.constant 0 : i32
    return %arg0, %c0_i32, %c0_i32_0 : i32, i32, i32
  }
}

</mosaic_0001>

<llo_original>
// kernel: attention_sketch_forward.1
$region0: #{attention_sketch_forward.1}
  #allocation0 [shape = 'u32[]', space=smem, size = 0x4, offset = 0x4, fixed_abs, tag = 'smem constant byte address 0x4 - core index']
  #allocation1 [shape = 'u32[72,128]{1,0:T(1,128)}', space=vmem, size = 0x9000, scoped, tag = 'internal scratch']
  %s0 = inlined_call_operand.vmem [shape: f32[2,64,64], index: 0, kind: input, shape index: {}]
  %s1 = inlined_call_operand.vmem [shape: f32[2,64,72], index: 1, kind: input, shape index: {}]
  %s2 = inlined_call_operand.vmem [shape: f32[2,64,1], index: 2, kind: input, shape index: {}]
  %s3 = inlined_call_operand.vmem [shape: f32[64,208], index: 3, kind: input, shape index: {}]
  %s4 = inlined_call_operand.vmem [shape: f32[1,208], index: 4, kind: input, shape index: {}]
  %s5 = inlined_call_operand.vmem [shape: f32[1,64], index: 5, kind: input, shape index: {}]
  %s6 = inlined_call_operand.vmem [shape: f32[1,64], index: 6, kind: input, shape index: {}]
  %s7 = inlined_call_operand.vmem [shape: f32[1,64], index: 7, kind: input, shape index: {}]
  %s8 = inlined_call_operand.vmem [shape: f32[1,64], index: 8, kind: input, shape index: {}]
  %s9 = inlined_call_operand.vmem [shape: f32[64,64], index: 9, kind: input, shape index: {}]
  %s10 = inlined_call_operand.vmem [shape: f32[1,64], index: 10, kind: input, shape index: {}]
  %s11 = inlined_call_operand.hbm [shape: f32[2,64,64], index: 11, kind: output, shape index: {}]
  %s12 = sld [smem:[#allocation0]]
  $region77: #{attention_sketch_forward.1} parent=0
    _
  %s14 = ssub.s32 1, %s12
  %s15 = scalar_select 0, %s14, %s12
  $region1: #{attention_sketch_forward.1} parent=0
    #allocation2 [shape = 'u8[65536]{0}', space=vmem, size = 0x10000, scoped, tag = 'output window, operand 0']
    #allocation3 [shape = 's32[2]{0}', space=sflag, size = 0x8, scoped, tag = 'scoped memory for attention_sketch_forward.1']
    %16 = vsyncpa [#allocation3], 0
    %s17 = scalar_lea.sflag [#allocation3], 1
    %18 = vsyncpa %s17, 0
    loop: start=0, step=1, limit=4
    $region2: #{attention_sketch_forward.1} parent=1 // loop_pre_header
      _
    $region3: #{attention_sketch_forward.1} parent=1 // loop_header
      %s20 = sphi 0, %s24
      %p21 = scmp.ge.s32.totalorder %s20, 4
      %s30 = sphi 0, %s32
      %s33 = sphi 0, %s30
      %s34 = sphi 0, %s33
      %s50 = sphi 0, %s34
      %s56 = sphi 0, %s58
      %s59 = sphi 0, %s56
      %s60 = sphi 0, %s59
      %s76 = sphi 0, %s60
      %s82 = sphi 0, %s84
      %s85 = sphi 0, %s82
      %s86 = sphi 0, %s85
      %s102 = sphi 0, %s86
      %s106 = sphi 0, %s106
      %s108 = sphi 0, %s106
      %s109 = sphi 0, %s108
      %s123 = sphi 0, %s109
      %s127 = sphi 0, %s127
      %s129 = sphi 0, %s127
      %s130 = sphi 0, %s129
      %s144 = sphi 0, %s130
      %s148 = sphi 0, %s148
      %s150 = sphi 0, %s148
      %s151 = sphi 0, %s150
      %s165 = sphi 0, %s151
      %s169 = sphi 0, %s169
      %s171 = sphi 0, %s169
      %s172 = sphi 0, %s171
      %s186 = sphi 0, %s172
      %s190 = sphi 0, %s190
      %s192 = sphi 0, %s190
      %s193 = sphi 0, %s192
      %s207 = sphi 0, %s193
      %s211 = sphi 0, %s211
      %s213 = sphi 0, %s211
      %s214 = sphi 0, %s213
      %s228 = sphi 0, %s214
      %s232 = sphi 0, %s232
      %s234 = sphi 0, %s232
      %s235 = sphi 0, %s234
      %s249 = sphi 0, %s235
      %s253 = sphi 0, %s253
      %s255 = sphi 0, %s253
      %s256 = sphi 0, %s255
      %s270 = sphi 0, %s256
      %s276 = sphi 0, %s278
      %s279 = sphi 0, %s276
      %s280 = sphi 0, %s279
      %s296 = sphi 0, %s280
    $region4: #{attention_sketch_forward.1} parent=1 // loop_header_branch
      %23 = sbr.rel (%p21) target = $region8
    $region5: #{attention_sketch_forward.1} parent=1 // loop_body
      %s25 = ssub.s32 %s20, 1
      %s26 = ssub.s32 %s20, 2
      %s27 = sadd.s32 %s20, 1
      %s28 = ssub.s32 %s20, %s27
      %p29 = scmp.eq.s32.totalorder %s28, 0
      %s31 = sadd.s32 %s30, 1
      %s32 = scalar_select %p29, %s30, %s31
      %p35 = pneg %p29
      %p36 = scmp.eq.s32.totalorder %s20, 1
      %p37 = por %p35, %p36
      %p38 = scmp.ne.s32.totalorder %s30, %s33
      %p39 = scmp.eq.s32.totalorder %s20, 0
      %p40 = por %p38, %p39
      %p41 = scmp.ne.s32.totalorder %s30, %s33
      %p42 = scmp.eq.s32.totalorder %s25, 1
      %p43 = por %p41, %p42
      %p44 = scmp.ne.s32.totalorder %s33, %s34
      %p45 = scmp.eq.s32.totalorder %s25, 0
      %p46 = por %p44, %p45
      %p47 = scmp.ne.s32.totalorder %s33, %s34
      %p48 = scmp.eq.s32.totalorder %s26, 1
      %p49 = por %p47, %p48
      %p51 = scmp.ne.s32.totalorder %s34, %s50
      %p52 = scmp.eq.s32.totalorder %s26, 0
      %p53 = por %p51, %p52
      %s54 = ssub.s32 %s20, %s27
      %p55 = scmp.eq.s32.totalorder %s54, 0
      %s57 = sadd.s32 %s56, 1
      %s58 = scalar_select %p55, %s56, %s57
      %p61 = pneg %p55
      %p62 = scmp.eq.s32.totalorder %s20, 1
      %p63 = por %p61, %p62
      %p64 = scmp.ne.s32.totalorder %s56, %s59
      %p65 = scmp.eq.s32.totalorder %s20, 0
      %p66 = por %p64, %p65
      %p67 = scmp.ne.s32.totalorder %s56, %s59
      %p68 = scmp.eq.s32.totalorder %s25, 1
      %p69 = por %p67, %p68
      %p70 = scmp.ne.s32.totalorder %s59, %s60
      %p71 = scmp.eq.s32.totalorder %s25, 0
      %p72 = por %p70, %p71
      %p73 = scmp.ne.s32.totalorder %s59, %s60
      %p74 = scmp.eq.s32.totalorder %s26, 1
      %p75 = por %p73, %p74
      %p77 = scmp.ne.s32.totalorder %s60, %s76
      %p78 = scmp.eq.s32.totalorder %s26, 0
      %p79 = por %p77, %p78
      %s80 = ssub.s32 %s20, %s27
      %p81 = scmp.eq.s32.totalorder %s80, 0
      %s83 = sadd.s32 %s82, 1
      %s84 = scalar_select %p81, %s82, %s83
      %p87 = pneg %p81
      %p88 = scmp.eq.s32.totalorder %s20, 1
      %p89 = por %p87, %p88
      %p90 = scmp.ne.s32.totalorder %s82, %s85
      %p91 = scmp.eq.s32.totalorder %s20, 0
      %p92 = por %p90, %p91
      %p93 = scmp.ne.s32.totalorder %s82, %s85
      %p94 = scmp.eq.s32.totalorder %s25, 1
      %p95 = por %p93, %p94
      %p96 = scmp.ne.s32.totalorder %s85, %s86
      %p97 = scmp.eq.s32.totalorder %s25, 0
      %p98 = por %p96, %p97
      %p99 = scmp.ne.s32.totalorder %s85, %s86
      %p100 = scmp.eq.s32.totalorder %s26, 1
      %p101 = por %p99, %p100
      %p103 = scmp.ne.s32.totalorder %s86, %s102
      %p104 = scmp.eq.s32.totalorder %s26, 0
      %p105 = por %p103, %p104
      %s107 = sadd.s32 %s106, 1
      %p110 = scmp.eq.s32.totalorder %s20, 1
      %p111 = scmp.ne.s32.totalorder %s106, %s108
      %p112 = scmp.eq.s32.totalorder %s20, 0
      %p113 = por %p111, %p112
      %p114 = scmp.ne.s32.totalorder %s106, %s108
      %p115 = scmp.eq.s32.totalorder %s25, 1
      %p116 = por %p114, %p115
      %p117 = scmp.ne.s32.totalorder %s108, %s109
      %p118 = scmp.eq.s32.totalorder %s25, 0
      %p119 = por %p117, %p118
      %p120 = scmp.ne.s32.totalorder %s108, %s109
      %p121 = scmp.eq.s32.totalorder %s26, 1
      %p122 = por %p120, %p121
      %p124 = scmp.ne.s32.totalorder %s109, %s123
      %p125 = scmp.eq.s32.totalorder %s26, 0
      %p126 = por %p124, %p125
      %s128 = sadd.s32 %s127, 1
      %p131 = scmp.eq.s32.totalorder %s20, 1
      %p132 = scmp.ne.s32.totalorder %s127, %s129
      %p133 = scmp.eq.s32.totalorder %s20, 0
      %p134 = por %p132, %p133
      %p135 = scmp.ne.s32.totalorder %s127, %s129
      %p136 = scmp.eq.s32.totalorder %s25, 1
      %p137 = por %p135, %p136
      %p138 = scmp.ne.s32.totalorder %s129, %s130
      %p139 = scmp.eq.s32.totalorder %s25, 0
      %p140 = por %p138, %p139
      %p141 = scmp.ne.s32.totalorder %s129, %s130
      %p142 = scmp.eq.s32.totalorder %s26, 1
      %p143 = por %p141, %p142
      %p145 = scmp.ne.s32.totalorder %s130, %s144
      %p146 = scmp.eq.s32.totalorder %s26, 0
      %p147 = por %p145, %p146
      %s149 = sadd.s32 %s148, 1
      %p152 = scmp.eq.s32.totalorder %s20, 1
      %p153 = scmp.ne.s32.totalorder %s148, %s150
      %p154 = scmp.eq.s32.totalorder %s20, 0
      %p155 = por %p153, %p154
      %p156 = scmp.ne.s32.totalorder %s148, %s150
      %p157 = scmp.eq.s32.totalorder %s25, 1
      %p158 = por %p156, %p157
      %p159 = scmp.ne.s32.totalorder %s150, %s151
      %p160 = scmp.eq.s32.totalorder %s25, 0
      %p161 = por %p159, %p160
      %p162 = scmp.ne.s32.totalorder %s150, %s151
      %p163 = scmp.eq.s32.totalorder %s26, 1
      %p164 = por %p162, %p163
      %p166 = scmp.ne.s32.totalorder %s151, %s165
      %p167 = scmp.eq.s32.totalorder %s26, 0
      %p168 = por %p166, %p167
      %s170 = sadd.s32 %s169, 1
      %p173 = scmp.eq.s32.totalorder %s20, 1
      %p174 = scmp.ne.s32.totalorder %s169, %s171
      %p175 = scmp.eq.s32.totalorder %s20, 0
      %p176 = por %p174, %p175
      %p177 = scmp.ne.s32.totalorder %s169, %s171
      %p178 = scmp.eq.s32.totalorder %s25, 1
      %p179 = por %p177, %p178
      %p180 = scmp.ne.s32.totalorder %s171, %s172
      %p181 = scmp.eq.s32.totalorder %s25, 0
      %p182 = por %p180, %p181
      %p183 = scmp.ne.s32.totalorder %s171, %s172
      %p184 = scmp.eq.s32.totalorder %s26, 1
      %p185 = por %p183, %p184
      %p187 = scmp.ne.s32.totalorder %s172, %s186
      %p188 = scmp.eq.s32.totalorder %s26, 0
      %p189 = por %p187, %p188
      %s191 = sadd.s32 %s190, 1
      %p194 = scmp.eq.s32.totalorder %s20, 1
      %p195 = scmp.ne.s32.totalorder %s190, %s192
      %p196 = scmp.eq.s32.totalorder %s20, 0
      %p197 = por %p195, %p196
      %p198 = scmp.ne.s32.totalorder %s190, %s192
      %p199 = scmp.eq.s32.totalorder %s25, 1
      %p200 = por %p198, %p199
      %p201 = scmp.ne.s32.totalorder %s192, %s193
      %p202 = scmp.eq.s32.totalorder %s25, 0
      %p203 = por %p201, %p202
      %p204 = scmp.ne.s32.totalorder %s192, %s193
      %p205 = scmp.eq.s32.totalorder %s26, 1
      %p206 = por %p204, %p205
      %p208 = scmp.ne.s32.totalorder %s193, %s207
      %p209 = scmp.eq.s32.totalorder %s26, 0
      %p210 = por %p208, %p209
      %s212 = sadd.s32 %s211, 1
      %p215 = scmp.eq.s32.totalorder %s20, 1
      %p216 = scmp.ne.s32.totalorder %s211, %s213
      %p217 = scmp.eq.s32.totalorder %s20, 0
      %p218 = por %p216, %p217
      %p219 = scmp.ne.s32.totalorder %s211, %s213
      %p220 = scmp.eq.s32.totalorder %s25, 1
      %p221 = por %p219, %p220
      %p222 = scmp.ne.s32.totalorder %s213, %s214
      %p223 = scmp.eq.s32.totalorder %s25, 0
      %p224 = por %p222, %p223
      %p225 = scmp.ne.s32.totalorder %s213, %s214
      %p226 = scmp.eq.s32.totalorder %s26, 1
      %p227 = por %p225, %p226
      %p229 = scmp.ne.s32.totalorder %s214, %s228
      %p230 = scmp.eq.s32.totalorder %s26, 0
      %p231 = por %p229, %p230
      %s233 = sadd.s32 %s232, 1
      %p236 = scmp.eq.s32.totalorder %s20, 1
      %p237 = scmp.ne.s32.totalorder %s232, %s234
      %p238 = scmp.eq.s32.totalorder %s20, 0
      %p239 = por %p237, %p238
      %p240 = scmp.ne.s32.totalorder %s232, %s234
      %p241 = scmp.eq.s32.totalorder %s25, 1
      %p242 = por %p240, %p241
      %p243 = scmp.ne.s32.totalorder %s234, %s235
      %p244 = scmp.eq.s32.totalorder %s25, 0
      %p245 = por %p243, %p244
      %p246 = scmp.ne.s32.totalorder %s234, %s235
      %p247 = scmp.eq.s32.totalorder %s26, 1
      %p248 = por %p246, %p247
      %p250 = scmp.ne.s32.totalorder %s235, %s249
      %p251 = scmp.eq.s32.totalorder %s26, 0
      %p252 = por %p250, %p251
      %s254 = sadd.s32 %s253, 1
      %p257 = scmp.eq.s32.totalorder %s20, 1
      %p258 = scmp.ne.s32.totalorder %s253, %s255
      %p259 = scmp.eq.s32.totalorder %s20, 0
      %p260 = por %p258, %p259
      %p261 = scmp.ne.s32.totalorder %s253, %s255
      %p262 = scmp.eq.s32.totalorder %s25, 1
      %p263 = por %p261, %p262
      %p264 = scmp.ne.s32.totalorder %s255, %s256
      %p265 = scmp.eq.s32.totalorder %s25, 0
      %p266 = por %p264, %p265
      %p267 = scmp.ne.s32.totalorder %s255, %s256
      %p268 = scmp.eq.s32.totalorder %s26, 1
      %p269 = por %p267, %p268
      %p271 = scmp.ne.s32.totalorder %s256, %s270
      %p272 = scmp.eq.s32.totalorder %s26, 0
      %p273 = por %p271, %p272
      %s274 = ssub.s32 %s20, %s27
      %p275 = scmp.eq.s32.totalorder %s274, 0
      %s277 = sadd.s32 %s276, 1
      %s278 = scalar_select %p275, %s276, %s277
      %p281 = pneg %p275
      %p282 = scmp.eq.s32.totalorder %s20, 1
      %p283 = por %p281, %p282
      %p284 = scmp.ne.s32.totalorder %s276, %s279
      %p285 = scmp.eq.s32.totalorder %s20, 0
      %p286 = por %p284, %p285
      %p287 = scmp.ne.s32.totalorder %s276, %s279
      %p288 = scmp.eq.s32.totalorder %s25, 1
      %p289 = por %p287, %p288
      %p290 = scmp.ne.s32.totalorder %s279, %s280
      %p291 = scmp.eq.s32.totalorder %s25, 0
      %p292 = por %p290, %p291
      %p293 = scmp.ne.s32.totalorder %s279, %s280
      %p294 = scmp.eq.s32.totalorder %s26, 1
      %p295 = por %p293, %p294
      %p297 = scmp.ne.s32.totalorder %s280, %s296
      %p298 = scmp.eq.s32.totalorder %s26, 0
      %p299 = por %p297, %p298
      %p300 = scmp.le.s32.totalorder 1, %s20
      %p301 = scmp.lt.s32.totalorder %s20, 3
      %p302 = pnand %p300, %p301
      %p303 = pneg %p302
      // Predicated region
      $region9: #{attention_sketch_forward.1} parent=5 // pred_check
        _
      $region10: #{attention_sketch_forward.1} parent=5 // pred_check_branch
        %305 = sbr.rel (%p302) target = $region12
      $region11: #{attention_sketch_forward.1} parent=5 // pred_region
        %s306 = ssub.s32 %s20, 1
        // Predicated region
        $region13: #{attention_sketch_forward.1} parent=11 // pred_check
          %p307 = pneg %p119
        $region14: #{attention_sketch_forward.1} parent=11 // pred_check_branch
          %309 = sbr.rel (%p307) target = $region16
        $region15: #{attention_sketch_forward.1} parent=11 // pred_region
          _
        $region16: #{attention_sketch_forward.1} parent=11 // pred_fallthru
          _
        // Predicated region
        $region17: #{attention_sketch_forward.1} parent=11 // pred_check
          %p310 = pneg %p140
        $region18: #{attention_sketch_forward.1} parent=11 // pred_check_branch
          %312 = sbr.rel (%p310) target = $region20
        $region19: #{attention_sketch_forward.1} parent=11 // pred_region
          _
        $region20: #{attention_sketch_forward.1} parent=11 // pred_fallthru
          _
        // Predicated region
        $region21: #{attention_sketch_forward.1} parent=11 // pred_check
          %p313 = pneg %p161
        $region22: #{attention_sketch_forward.1} parent=11 // pred_check_branch
          %315 = sbr.rel (%p313) target = $region24
        $region23: #{attention_sketch_forward.1} parent=11 // pred_region
          _
        $region24: #{attention_sketch_forward.1} parent=11 // pred_fallthru
          _
        // Predicated region
        $region25: #{attention_sketch_forward.1} parent=11 // pred_check
          %p316 = pneg %p182
        $region26: #{attention_sketch_forward.1} parent=11 // pred_check_branch
          %318 = sbr.rel (%p316) target = $region28
        $region27: #{attention_sketch_forward.1} parent=11 // pred_region
          _
        $region28: #{attention_sketch_forward.1} parent=11 // pred_fallthru
          _
        // Predicated region
        $region29: #{attention_sketch_forward.1} parent=11 // pred_check
          %p319 = pneg %p203
        $region30: #{attention_sketch_forward.1} parent=11 // pred_check_branch
          %321 = sbr.rel (%p319) target = $region32
        $region31: #{attention_sketch_forward.1} parent=11 // pred_region
          _
        $region32: #{attention_sketch_forward.1} parent=11 // pred_fallthru
          _
        // Predicated region
        $region33: #{attention_sketch_forward.1} parent=11 // pred_check
          %p322 = pneg %p224
        $region34: #{attention_sketch_forward.1} parent=11 // pred_check_branch
          %324 = sbr.rel (%p322) target = $region36
        $region35: #{attention_sketch_forward.1} parent=11 // pred_region
          _
        $region36: #{attention_sketch_forward.1} parent=11 // pred_fallthru
          _
        // Predicated region
        $region37: #{attention_sketch_forward.1} parent=11 // pred_check
          %p325 = pneg %p245
        $region38: #{attention_sketch_forward.1} parent=11 // pred_check_branch
          %327 = sbr.rel (%p325) target = $region40
        $region39: #{attention_sketch_forward.1} parent=11 // pred_region
          _
        $region40: #{attention_sketch_forward.1} parent=11 // pred_fallthru
          _
        // Predicated region
        $region41: #{attention_sketch_forward.1} parent=11 // pred_check
          %p328 = pneg %p266
        $region42: #{attention_sketch_forward.1} parent=11 // pred_check_branch
          %330 = sbr.rel (%p328) target = $region44
        $region43: #{attention_sketch_forward.1} parent=11 // pred_region
          _
        $region44: #{attention_sketch_forward.1} parent=11 // pred_fallthru
          _
      $region12: #{attention_sketch_forward.1} parent=5 // pred_fallthru
        _
      %p331 = scmp.lt.s32.totalorder %s20, 2
      // Predicated region
      $region45: #{attention_sketch_forward.1} parent=5 // pred_check
        %p332 = pneg %p331
      $region46: #{attention_sketch_forward.1} parent=5 // pred_check_branch
        %334 = sbr.rel (%p332) target = $region48
      $region47: #{attention_sketch_forward.1} parent=5 // pred_region
        // Predicated region
        $region49: #{attention_sketch_forward.1} parent=47 // pred_check
          %p335 = pneg %p40
        $region50: #{attention_sketch_forward.1} parent=47 // pred_check_branch
          %337 = sbr.rel (%p335) target = $region52
        $region51: #{attention_sketch_forward.1} parent=47 // pred_region
          %p338 = scmp.lt.s32.totalorder %s20, 1
          %s339 = scalar_select %p338, %s20, 1
          %s340 = smul.addr %s339, 8
          %s341 = smul.addr %s340, 8
          %s342 = scalar_lea.vmem %s0, %s341
        $region52: #{attention_sketch_forward.1} parent=47 // pred_fallthru
          _
        // Predicated region
        $region53: #{attention_sketch_forward.1} parent=47 // pred_check
          %p343 = pneg %p66
        $region54: #{attention_sketch_forward.1} parent=47 // pred_check_branch
          %345 = sbr.rel (%p343) target = $region56
        $region55: #{attention_sketch_forward.1} parent=47 // pred_region
          %p346 = scmp.lt.s32.totalorder %s20, 1
          %s347 = scalar_select %p346, %s20, 1
          %s348 = smul.addr %s347, 8
          %s349 = smul.addr %s348, 8
          %s350 = scalar_lea.vmem %s1, %s349
        $region56: #{attention_sketch_forward.1} parent=47 // pred_fallthru
          _
        // Predicated region
        $region57: #{attention_sketch_forward.1} parent=47 // pred_check
          %p351 = pneg %p92
        $region58: #{attention_sketch_forward.1} parent=47 // pred_check_branch
          %353 = sbr.rel (%p351) target = $region60
        $region59: #{attention_sketch_forward.1} parent=47 // pred_region
          %p354 = scmp.lt.s32.totalorder %s20, 1
          %s355 = scalar_select %p354, %s20, 1
          %s356 = smul.addr %s355, 8
          %s357 = smul.addr %s356, 8
          %s358 = scalar_lea.vmem %s2, %s357
        $region60: #{attention_sketch_forward.1} parent=47 // pred_fallthru
          _
      $region48: #{attention_sketch_forward.1} parent=5 // pred_fallthru
        _
      %p359 = scmp.le.s32.totalorder 1, %s20
      %p360 = scmp.lt.s32.totalorder %s20, 3
      %p361 = pnand %p359, %p360
      %p362 = pneg %p361
      // Predicated region
      $region61: #{attention_sketch_forward.1} parent=5 // pred_check
        _
      $region62: #{attention_sketch_forward.1} parent=5 // pred_check_branch
        %364 = sbr.rel (%p361) target = $region64
      $region63: #{attention_sketch_forward.1} parent=5 // pred_region
        %s365 = ssub.s32 %s20, 1
        %p366 = scmp.lt.s32.totalorder %s25, 1
        %s367 = scalar_select %p366, %s25, 1
        %s368 = smul.addr %s367, 8
        %s369 = smul.addr %s368, 8
        %s370 = scalar_lea.vmem %s0, %s369
        %p371 = pneg %p46
        %p372 = pneg %p43
        %p373 = scmp.lt.s32.totalorder %s25, 1
        %s374 = scalar_select %p373, %s25, 1
        %s375 = smul.addr %s374, 8
        %s376 = smul.addr %s375, 8
        %s377 = scalar_lea.vmem %s1, %s376
        %p378 = pneg %p72
        %p379 = pneg %p69
        %p380 = scmp.lt.s32.totalorder %s25, 1
        %s381 = scalar_select %p380, %s25, 1
        %s382 = smul.addr %s381, 8
        %s383 = smul.addr %s382, 8
        %s384 = scalar_lea.vmem %s2, %s383
        %p385 = pneg %p98
        %p386 = pneg %p95
        %p387 = pneg %p119
        %p388 = pneg %p116
        %p389 = pneg %p140
        %p390 = pneg %p137
        %p391 = pneg %p161
        %p392 = pneg %p158
        %p393 = pneg %p182
        %p394 = pneg %p179
        %p395 = pneg %p203
        %p396 = pneg %p200
        %p397 = pneg %p224
        %p398 = pneg %p221
        %p399 = pneg %p245
        %p400 = pneg %p242
        %p401 = pneg %p266
        %p402 = pneg %p263
        %p403 = pneg %p292
        %p404 = pneg %p289
        %s405 = sand.u32 %s279, 1
        %s406 = scalar_lea.sflag [#allocation3], %s405
        %s407 = sand.u32 %s279, 1
        %s408 = smul.addr %s407, 64
        %s409 = scalar_lea.vmem [#allocation2], %s408
        %p410 = scmp.lt.s32.totalorder %s25, 1
        %s411 = scalar_select %p410, %s25, 1
        %s412 = smul.addr %s411, 8
        %s413 = smul.addr %s412, 8
        %s414 = scalar_lea.vmem %s0, %s413
        %p415 = scmp.lt.s32.totalorder %s25, 1
        %s416 = scalar_select %p415, %s25, 1
        %s417 = smul.addr %s416, 8
        %s418 = smul.addr %s417, 8
        %s419 = scalar_lea.vmem %s1, %s418
        %p420 = scmp.lt.s32.totalorder %s25, 1
        %s421 = scalar_select %p420, %s25, 1
        %s422 = smul.addr %s421, 8
        %s423 = smul.addr %s422, 8
        %s424 = scalar_lea.vmem %s2, %s423
        %v425 = vld [vmem:[%s414] sm:$0xff]
        %v426 = vld [vmem:[%s414 + $0x8] sm:$0xff]
        %v427 = vld [vmem:[%s414 + $0x10] sm:$0xff]
        %v428 = vld [vmem:[%s414 + $0x18] sm:$0xff]
        %v429 = vld [vmem:[%s414 + $0x20] sm:$0xff]
        %v430 = vld [vmem:[%s414 + $0x28] sm:$0xff]
        %v431 = vld [vmem:[%s414 + $0x30] sm:$0xff]
        %v432 = vld [vmem:[%s414 + $0x38] sm:$0xff]
        %v433 = vld [vmem:[%s419] sm:$0xff]
        %v434 = vld [vmem:[%s419 + $0x8] sm:$0xff]
        %v435 = vld [vmem:[%s419 + $0x10] sm:$0xff]
        %v436 = vld [vmem:[%s419 + $0x18] sm:$0xff]
        %v437 = vld [vmem:[%s419 + $0x20] sm:$0xff]
        %v438 = vld [vmem:[%s419 + $0x28] sm:$0xff]
        %v439 = vld [vmem:[%s419 + $0x30] sm:$0xff]
        %v440 = vld [vmem:[%s419 + $0x38] sm:$0xff]
        %v441 = vld [vmem:[%s424] sm:$0xff]
        %v442 = vld [vmem:[%s424 + $0x8] sm:$0xff]
        %v443 = vld [vmem:[%s424 + $0x10] sm:$0xff]
        %v444 = vld [vmem:[%s424 + $0x18] sm:$0xff]
        %v445 = vld [vmem:[%s424 + $0x20] sm:$0xff]
        %v446 = vld [vmem:[%s424 + $0x28] sm:$0xff]
        %v447 = vld [vmem:[%s424 + $0x30] sm:$0xff]
        %v448 = vld [vmem:[%s424 + $0x38] sm:$0xff]
        %v449 = vld [vmem:[%s3] sm:$0xff]
        %v450 = vld [vmem:[%s3 + $0x8] sm:$0xff]
        %v451 = vld [vmem:[%s3 + $0x10] sm:$0xff]
        %v452 = vld [vmem:[%s3 + $0x18] sm:$0xff]
        %v453 = vld [vmem:[%s3 + $0x20] sm:$0xff]
        %v454 = vld [vmem:[%s3 + $0x28] sm:$0xff]
        %v455 = vld [vmem:[%s3 + $0x30] sm:$0xff]
        %v456 = vld [vmem:[%s3 + $0x38] sm:$0xff]
        %v457 = vld [vmem:[%s3 + $0x40] sm:$0xff]
        %v458 = vld [vmem:[%s3 + $0x48] sm:$0xff]
        %v459 = vld [vmem:[%s3 + $0x50] sm:$0xff]
        %v460 = vld [vmem:[%s3 + $0x58] sm:$0xff]
        %v461 = vld [vmem:[%s3 + $0x60] sm:$0xff]
        %v462 = vld [vmem:[%s3 + $0x68] sm:$0xff]
        %v463 = vld [vmem:[%s3 + $0x70] sm:$0xff]
        %v464 = vld [vmem:[%s3 + $0x78] sm:$0xff]
        %v465 = vld [vmem:[%s4] sm:$0x3]
        %v467 = vperm.slane %v465, 0
        %v468 = vperm.slane %v465, 1
        %vm471 = vcmask 523264
        %v473 = vsel %vm471, %v425, 0
        %v476 = vsel %vm471, %v426, 0
        %v479 = vsel %vm471, %v427, 0
        %v482 = vsel %vm471, %v428, 0
        %v485 = vsel %vm471, %v429, 0
        %v488 = vsel %vm471, %v430, 0
        %v491 = vsel %vm471, %v431, 0
        %v494 = vsel %vm471, %v432, 0
        %496 = vmatpush.msra.mxu0 0.0
        %497 = vmatpush.msra.mxu0 0.0
        %498 = vmatpush.msra.mxu0 0.0
        %499 = vmatpush.msra.mxu0 0.0
        %500 = vmatpush.msra.mxu0 0.0
        %501 = vmatpush.msra.mxu0 0.0
        %502 = vmatpush.msra.mxu0 0.0
        %503 = vmatpush.msra.mxu0 0.0
        %504 = vmatpush.msra.mxu0 %v463
        %505 = vmatpush.msra.mxu0 %v461
        %506 = vmatpush.msra.mxu0 %v459
        %507 = vmatpush.msra.mxu0 %v457
        %508 = vmatpush.msra.mxu0 %v455
        %509 = vmatpush.msra.mxu0 %v453
        %510 = vmatpush.msra.mxu0 %v451
        %511 = vmatpush.msra.mxu0 %v449
        %512 = vmatmul.f32.gmra.mxu0 %v473
        %v513 = vpop.f32.mrf.mxu0
        %v514 = vadd.f32 %v467, %v513
        %515 = vmatmul.f32.gmra.mxu0 %v476
        %v516 = vpop.f32.mrf.mxu0
        %v517 = vadd.f32 %v467, %v516
        %518 = vmatmul.f32.gmra.mxu0 %v479
        %v519 = vpop.f32.mrf.mxu0
        %v520 = vadd.f32 %v467, %v519
        %521 = vmatmul.f32.gmra.mxu0 %v482
        %v522 = vpop.f32.mrf.mxu0
        %v523 = vadd.f32 %v467, %v522
        %524 = vmatmul.f32.gmra.mxu0 %v485
        %v525 = vpop.f32.mrf.mxu0
        %v526 = vadd.f32 %v467, %v525
        %527 = vmatmul.f32.gmra.mxu0 %v488
        %v528 = vpop.f32.mrf.mxu0
        %v529 = vadd.f32 %v467, %v528
        %530 = vmatmul.f32.gmra.mxu0 %v491
        %v531 = vpop.f32.mrf.mxu0
        %v532 = vadd.f32 %v467, %v531
        %533 = vmatmul.f32.gmra.mxu0 %v494
        %v534 = vpop.f32.mrf.mxu0
        %v535 = vadd.f32 %v467, %v534
        %536 = vdwg.mxu0
        %537 = vmatpush.msra.mxu0 0.0
        %538 = vmatpush.msra.mxu0 0.0
        %539 = vmatpush.msra.mxu0 0.0
        %540 = vmatpush.msra.mxu0 0.0
        %541 = vmatpush.msra.mxu0 0.0
        %542 = vmatpush.msra.mxu0 0.0
        %543 = vmatpush.msra.mxu0 0.0
        %544 = vmatpush.msra.mxu0 0.0
        %545 = vmatpush.msra.mxu0 %v464
        %546 = vmatpush.msra.mxu0 %v462
        %547 = vmatpush.msra.mxu0 %v460
        %548 = vmatpush.msra.mxu0 %v458
        %549 = vmatpush.msra.mxu0 %v456
        %550 = vmatpush.msra.mxu0 %v454
        %551 = vmatpush.msra.mxu0 %v452
        %552 = vmatpush.msra.mxu0 %v450
        %553 = vmatmul.f32.gmra.mxu0 %v473
        %v554 = vpop.f32.mrf.mxu0
        %v555 = vadd.f32 %v468, %v554
        %556 = vmatmul.f32.gmra.mxu0 %v476
        %v557 = vpop.f32.mrf.mxu0
        %v558 = vadd.f32 %v468, %v557
        %559 = vmatmul.f32.gmra.mxu0 %v479
        %v560 = vpop.f32.mrf.mxu0
        %v561 = vadd.f32 %v468, %v560
        %562 = vmatmul.f32.gmra.mxu0 %v482
        %v563 = vpop.f32.mrf.mxu0
        %v564 = vadd.f32 %v468, %v563
        %565 = vmatmul.f32.gmra.mxu0 %v485
        %v566 = vpop.f32.mrf.mxu0
        %v567 = vadd.f32 %v468, %v566
        %568 = vmatmul.f32.gmra.mxu0 %v488
        %v569 = vpop.f32.mrf.mxu0
        %v570 = vadd.f32 %v468, %v569
        %571 = vmatmul.f32.gmra.mxu0 %v491
        %v572 = vpop.f32.mrf.mxu0
        %v573 = vadd.f32 %v468, %v572
        %574 = vmatmul.f32.gmra.mxu0 %v494
        %v575 = vpop.f32.mrf.mxu0
        %v576 = vadd.f32 %v468, %v575
        %577 = vdwg.mxu0
        %v578 = vmul.f32 %v514, 0.17677669
        %v579 = vmul.f32 %v517, 0.17677669
        %v580 = vmul.f32 %v520, 0.17677669
        %v581 = vmul.f32 %v523, 0.17677669
        %v582 = vmul.f32 %v526, 0.17677669
        %v583 = vmul.f32 %v529, 0.17677669
        %v584 = vmul.f32 %v532, 0.17677669
        %v585 = vmul.f32 %v535, 0.17677669
        %v586 = vld [vmem:[%s5] sm:$0x1]
        %v587 = vld [vmem:[%s6] sm:$0x1]
        %596 = vrot.lane.b32.xlu0 %v514, 64
        %v597 = vpop.permute.xlu0 %596
        %598 = vrot.lane.b32.xlu0 %v517, 64
        %v599 = vpop.permute.xlu0 %598
        %600 = vrot.lane.b32.xlu0 %v520, 64
        %v601 = vpop.permute.xlu0 %600
        %602 = vrot.lane.b32.xlu0 %v523, 64
        %v603 = vpop.permute.xlu0 %602
        %604 = vrot.lane.b32.xlu0 %v526, 64
        %v605 = vpop.permute.xlu0 %604
        %606 = vrot.lane.b32.xlu0 %v529, 64
        %v607 = vpop.permute.xlu0 %606
        %608 = vrot.lane.b32.xlu0 %v532, 64
        %v609 = vpop.permute.xlu0 %608
        %610 = vrot.lane.b32.xlu0 %v535, 64
        %v611 = vpop.permute.xlu0 %610
        %v620 = vsel %vm471, %v597, 0.0
        %621 = vadd.xlane.f32.xlu0 %v620
        %v622 = vpop.xlane.xlu0 %621
        %v623 = vsel %vm471, %v599, 0.0
        %624 = vadd.xlane.f32.xlu0 %v623
        %v625 = vpop.xlane.xlu0 %624
        %v626 = vsel %vm471, %v601, 0.0
        %627 = vadd.xlane.f32.xlu0 %v626
        %v628 = vpop.xlane.xlu0 %627
        %v629 = vsel %vm471, %v603, 0.0
        %630 = vadd.xlane.f32.xlu0 %v629
        %v631 = vpop.xlane.xlu0 %630
        %v632 = vsel %vm471, %v605, 0.0
        %633 = vadd.xlane.f32.xlu0 %v632
        %v634 = vpop.xlane.xlu0 %633
        %v635 = vsel %vm471, %v607, 0.0
        %636 = vadd.xlane.f32.xlu0 %v635
        %v637 = vpop.xlane.xlu0 %636
        %v638 = vsel %vm471, %v609, 0.0
        %639 = vadd.xlane.f32.xlu0 %v638
        %v640 = vpop.xlane.xlu0 %639
        %v641 = vsel %vm471, %v611, 0.0
        %642 = vadd.xlane.f32.xlu0 %v641
        %v643 = vpop.xlane.xlu0 %642
        %v644 = vrcp.pop 64.0
        %v645 = vmul.f32 64.0, %v644
        %v646 = vsub.f32 1.0, %v645
        %v647 = vmul.f32 %v644, %v646
        %v648 = vadd.f32 %v644, %v647
        %vm649 = vweird.f32 %v644
        %v650 = vsel %vm649, %v644, %v648
        %v651 = vmul.f32 %v622, %v650
        %v652 = vmul.f32 %v625, %v650
        %v653 = vmul.f32 %v628, %v650
        %v654 = vmul.f32 %v631, %v650
        %v655 = vmul.f32 %v634, %v650
        %v656 = vmul.f32 %v637, %v650
        %v657 = vmul.f32 %v640, %v650
        %v658 = vmul.f32 %v643, %v650
        %v659 = vsub.f32 %v514, %v651
        %v660 = vsub.f32 %v517, %v652
        %v661 = vsub.f32 %v520, %v653
        %v662 = vsub.f32 %v523, %v654
        %v663 = vsub.f32 %v526, %v655
        %v664 = vsub.f32 %v529, %v656
        %v665 = vsub.f32 %v532, %v657
        %v666 = vsub.f32 %v535, %v658
        %v667 = vmul.f32 %v659, %v659
        %v668 = vmul.f32 %v660, %v660
        %v669 = vmul.f32 %v661, %v661
        %v670 = vmul.f32 %v662, %v662
        %v671 = vmul.f32 %v663, %v663
        %v672 = vmul.f32 %v664, %v664
        %v673 = vmul.f32 %v665, %v665
        %v674 = vmul.f32 %v666, %v666
        %683 = vrot.lane.b32.xlu0 %v667, 64
        %v684 = vpop.permute.xlu0 %683
        %685 = vrot.lane.b32.xlu0 %v668, 64
        %v686 = vpop.permute.xlu0 %685
        %687 = vrot.lane.b32.xlu0 %v669, 64
        %v688 = vpop.permute.xlu0 %687
        %689 = vrot.lane.b32.xlu0 %v670, 64
        %v690 = vpop.permute.xlu0 %689
        %691 = vrot.lane.b32.xlu0 %v671, 64
        %v692 = vpop.permute.xlu0 %691
        %693 = vrot.lane.b32.xlu0 %v672, 64
        %v694 = vpop.permute.xlu0 %693
        %695 = vrot.lane.b32.xlu0 %v673, 64
        %v696 = vpop.permute.xlu0 %695
        %697 = vrot.lane.b32.xlu0 %v674, 64
        %v698 = vpop.permute.xlu0 %697
        %v707 = vsel %vm471, %v684, 0.0
        %708 = vadd.xlane.f32.xlu0 %v707
        %v709 = vpop.xlane.xlu0 %708
        %v710 = vsel %vm471, %v686, 0.0
        %711 = vadd.xlane.f32.xlu0 %v710
        %v712 = vpop.xlane.xlu0 %711
        %v713 = vsel %vm471, %v688, 0.0
        %714 = vadd.xlane.f32.xlu0 %v713
        %v715 = vpop.xlane.xlu0 %714
        %v716 = vsel %vm471, %v690, 0.0
        %717 = vadd.xlane.f32.xlu0 %v716
        %v718 = vpop.xlane.xlu0 %717
        %v719 = vsel %vm471, %v692, 0.0
        %720 = vadd.xlane.f32.xlu0 %v719
        %v721 = vpop.xlane.xlu0 %720
        %v722 = vsel %vm471, %v694, 0.0
        %723 = vadd.xlane.f32.xlu0 %v722
        %v724 = vpop.xlane.xlu0 %723
        %v725 = vsel %vm471, %v696, 0.0
        %726 = vadd.xlane.f32.xlu0 %v725
        %v727 = vpop.xlane.xlu0 %726
        %v728 = vsel %vm471, %v698, 0.0
        %729 = vadd.xlane.f32.xlu0 %v728
        %v730 = vpop.xlane.xlu0 %729
        %v731 = vmul.f32 %v709, %v650
        %v732 = vmul.f32 %v712, %v650
        %v733 = vmul.f32 %v715, %v650
        %v734 = vmul.f32 %v718, %v650
        %v735 = vmul.f32 %v721, %v650
        %v736 = vmul.f32 %v724, %v650
        %v737 = vmul.f32 %v727, %v650
        %v738 = vmul.f32 %v730, %v650
        %v739 = vadd.f32 %v731, 1e-05
        %v740 = vadd.f32 %v732, 1e-05
        %v741 = vadd.f32 %v733, 1e-05
        %v742 = vadd.f32 %v734, 1e-05
        %v743 = vadd.f32 %v735, 1e-05
        %v744 = vadd.f32 %v736, 1e-05
        %v745 = vadd.f32 %v737, 1e-05
        %v746 = vadd.f32 %v738, 1e-05
        %v747 = vrsqrt.pop %v739
        %v748 = vmul.f32 %v747, %v739
        %v749 = vmul.f32 %v748, %v747
        %v750 = vmul.f32 0.5, %v749
        %v751 = vsub.f32 1.5, %v750
        %v752 = vmul.f32 %v747, %v751
        %vm753 = vweird.f32 %v739
        %vm754 = vweird.f32 %v747
        %vm755 = vmor %vm753, %vm754
        %v756 = vsel %vm755, %v747, %v752
        %v757 = vrsqrt.pop %v740
        %v758 = vmul.f32 %v757, %v740
        %v759 = vmul.f32 %v758, %v757
        %v760 = vmul.f32 0.5, %v759
        %v761 = vsub.f32 1.5, %v760
        %v762 = vmul.f32 %v757, %v761
        %vm763 = vweird.f32 %v740
        %vm764 = vweird.f32 %v757
        %vm765 = vmor %vm763, %vm764
        %v766 = vsel %vm765, %v757, %v762
        %v767 = vrsqrt.pop %v741
        %v768 = vmul.f32 %v767, %v741
        %v769 = vmul.f32 %v768, %v767
        %v770 = vmul.f32 0.5, %v769
        %v771 = vsub.f32 1.5, %v770
        %v772 = vmul.f32 %v767, %v771
        %vm773 = vweird.f32 %v741
        %vm774 = vweird.f32 %v767
        %vm775 = vmor %vm773, %vm774
        %v776 = vsel %vm775, %v767, %v772
        %v777 = vrsqrt.pop %v742
        %v778 = vmul.f32 %v777, %v742
        %v779 = vmul.f32 %v778, %v777
        %v780 = vmul.f32 0.5, %v779
        %v781 = vsub.f32 1.5, %v780
        %v782 = vmul.f32 %v777, %v781
        %vm783 = vweird.f32 %v742
        %vm784 = vweird.f32 %v777
        %vm785 = vmor %vm783, %vm784
        %v786 = vsel %vm785, %v777, %v782
        %v787 = vrsqrt.pop %v743
        %v788 = vmul.f32 %v787, %v743
        %v789 = vmul.f32 %v788, %v787
        %v790 = vmul.f32 0.5, %v789
        %v791 = vsub.f32 1.5, %v790
        %v792 = vmul.f32 %v787, %v791
        %vm793 = vweird.f32 %v743
        %vm794 = vweird.f32 %v787
        %vm795 = vmor %vm793, %vm794
        %v796 = vsel %vm795, %v787, %v792
        %v797 = vrsqrt.pop %v744
        %v798 = vmul.f32 %v797, %v744
        %v799 = vmul.f32 %v798, %v797
        %v800 = vmul.f32 0.5, %v799
        %v801 = vsub.f32 1.5, %v800
        %v802 = vmul.f32 %v797, %v801
        %vm803 = vweird.f32 %v744
        %vm804 = vweird.f32 %v797
        %vm805 = vmor %vm803, %vm804
        %v806 = vsel %vm805, %v797, %v802
        %v807 = vrsqrt.pop %v745
        %v808 = vmul.f32 %v807, %v745
        %v809 = vmul.f32 %v808, %v807
        %v810 = vmul.f32 0.5, %v809
        %v811 = vsub.f32 1.5, %v810
        %v812 = vmul.f32 %v807, %v811
        %vm813 = vweird.f32 %v745
        %vm814 = vweird.f32 %v807
        %vm815 = vmor %vm813, %vm814
        %v816 = vsel %vm815, %v807, %v812
        %v817 = vrsqrt.pop %v746
        %v818 = vmul.f32 %v817, %v746
        %v819 = vmul.f32 %v818, %v817
        %v820 = vmul.f32 0.5, %v819
        %v821 = vsub.f32 1.5, %v820
        %v822 = vmul.f32 %v817, %v821
        %vm823 = vweird.f32 %v746
        %vm824 = vweird.f32 %v817
        %vm825 = vmor %vm823, %vm824
        %v826 = vsel %vm825, %v817, %v822
        %v827 = vmul.f32 %v659, %v756
        %v828 = vmul.f32 %v660, %v766
        %v829 = vmul.f32 %v661, %v776
        %v830 = vmul.f32 %v662, %v786
        %v831 = vmul.f32 %v663, %v796
        %v832 = vmul.f32 %v664, %v806
        %v833 = vmul.f32 %v665, %v816
        %v834 = vmul.f32 %v666, %v826
        %v836 = vperm.slane %v586, 0
        %838 = vrot.lane.b32.xlu0 %v836, 64
        %v839 = vpop.permute.xlu0 %838
        %v841 = vmul.f32 %v827, %v839
        %v842 = vmul.f32 %v828, %v839
        %v843 = vmul.f32 %v829, %v839
        %v844 = vmul.f32 %v830, %v839
        %v845 = vmul.f32 %v831, %v839
        %v846 = vmul.f32 %v832, %v839
        %v847 = vmul.f32 %v833, %v839
        %v848 = vmul.f32 %v834, %v839
        %v850 = vperm.slane %v587, 0
        %852 = vrot.lane.b32.xlu0 %v850, 64
        %v853 = vpop.permute.xlu0 %852
        %v855 = vadd.f32 %v841, %v853
        %v856 = vadd.f32 %v842, %v853
        %v857 = vadd.f32 %v843, %v853
        %v858 = vadd.f32 %v844, %v853
        %v859 = vadd.f32 %v845, %v853
        %v860 = vadd.f32 %v846, %v853
        %v861 = vadd.f32 %v847, %v853
        %v862 = vadd.f32 %v848, %v853
        %v863 = vsel %vm471, %v555, 0.0
        %864 = vadd.xlane.f32.xlu0 %v863
        %v865 = vpop.xlane.xlu0 %864
        %v866 = vsel %vm471, %v558, 0.0
        %867 = vadd.xlane.f32.xlu0 %v866
        %v868 = vpop.xlane.xlu0 %867
        %v869 = vsel %vm471, %v561, 0.0
        %870 = vadd.xlane.f32.xlu0 %v869
        %v871 = vpop.xlane.xlu0 %870
        %v872 = vsel %vm471, %v564, 0.0
        %873 = vadd.xlane.f32.xlu0 %v872
        %v874 = vpop.xlane.xlu0 %873
        %v875 = vsel %vm471, %v567, 0.0
        %876 = vadd.xlane.f32.xlu0 %v875
        %v877 = vpop.xlane.xlu0 %876
        %v878 = vsel %vm471, %v570, 0.0
        %879 = vadd.xlane.f32.xlu0 %v878
        %v880 = vpop.xlane.xlu0 %879
        %v881 = vsel %vm471, %v573, 0.0
        %882 = vadd.xlane.f32.xlu0 %v881
        %v883 = vpop.xlane.xlu0 %882
        %v884 = vsel %vm471, %v576, 0.0
        %885 = vadd.xlane.f32.xlu0 %v884
        %v886 = vpop.xlane.xlu0 %885
        %v887 = vmul.f32 %v865, %v650
        %v888 = vmul.f32 %v868, %v650
        %v889 = vmul.f32 %v871, %v650
        %v890 = vmul.f32 %v874, %v650
        %v891 = vmul.f32 %v877, %v650
        %v892 = vmul.f32 %v880, %v650
        %v893 = vmul.f32 %v883, %v650
        %v894 = vmul.f32 %v886, %v650
        %v895 = vsub.f32 %v555, %v887
        %v896 = vsub.f32 %v558, %v888
        %v897 = vsub.f32 %v561, %v889
        %v898 = vsub.f32 %v564, %v890
        %v899 = vsub.f32 %v567, %v891
        %v900 = vsub.f32 %v570, %v892
        %v901 = vsub.f32 %v573, %v893
        %v902 = vsub.f32 %v576, %v894
        %v903 = vmul.f32 %v895, %v895
        %v904 = vmul.f32 %v896, %v896
        %v905 = vmul.f32 %v897, %v897
        %v906 = vmul.f32 %v898, %v898
        %v907 = vmul.f32 %v899, %v899
        %v908 = vmul.f32 %v900, %v900
        %v909 = vmul.f32 %v901, %v901
        %v910 = vmul.f32 %v902, %v902
        %v911 = vsel %vm471, %v903, 0.0
        %912 = vadd.xlane.f32.xlu0 %v911
        %v913 = vpop.xlane.xlu0 %912
        %v914 = vsel %vm471, %v904, 0.0
        %915 = vadd.xlane.f32.xlu0 %v914
        %v916 = vpop.xlane.xlu0 %915
        %v917 = vsel %vm471, %v905, 0.0
        %918 = vadd.xlane.f32.xlu0 %v917
        %v919 = vpop.xlane.xlu0 %918
        %v920 = vsel %vm471, %v906, 0.0
        %921 = vadd.xlane.f32.xlu0 %v920
        %v922 = vpop.xlane.xlu0 %921
        %v923 = vsel %vm471, %v907, 0.0
        %924 = vadd.xlane.f32.xlu0 %v923
        %v925 = vpop.xlane.xlu0 %924
        %v926 = vsel %vm471, %v908, 0.0
        %927 = vadd.xlane.f32.xlu0 %v926
        %v928 = vpop.xlane.xlu0 %927
        %v929 = vsel %vm471, %v909, 0.0
        %930 = vadd.xlane.f32.xlu0 %v929
        %v931 = vpop.xlane.xlu0 %930
        %v932 = vsel %vm471, %v910, 0.0
        %933 = vadd.xlane.f32.xlu0 %v932
        %v934 = vpop.xlane.xlu0 %933
        %v935 = vmul.f32 %v913, %v650
        %v936 = vmul.f32 %v916, %v650
        %v937 = vmul.f32 %v919, %v650
        %v938 = vmul.f32 %v922, %v650
        %v939 = vmul.f32 %v925, %v650
        %v940 = vmul.f32 %v928, %v650
        %v941 = vmul.f32 %v931, %v650
        %v942 = vmul.f32 %v934, %v650
        %v943 = vadd.f32 %v935, 1e-05
        %v944 = vadd.f32 %v936, 1e-05
        %v945 = vadd.f32 %v937, 1e-05
        %v946 = vadd.f32 %v938, 1e-05
        %v947 = vadd.f32 %v939, 1e-05
        %v948 = vadd.f32 %v940, 1e-05
        %v949 = vadd.f32 %v941, 1e-05
        %v950 = vadd.f32 %v942, 1e-05
        %v951 = vrsqrt.pop %v943
        %v952 = vmul.f32 %v951, %v943
        %v953 = vmul.f32 %v952, %v951
        %v954 = vmul.f32 0.5, %v953
        %v955 = vsub.f32 1.5, %v954
        %v956 = vmul.f32 %v951, %v955
        %vm957 = vweird.f32 %v943
        %vm958 = vweird.f32 %v951
        %vm959 = vmor %vm957, %vm958
        %v960 = vsel %vm959, %v951, %v956
        %v961 = vrsqrt.pop %v944
        %v962 = vmul.f32 %v961, %v944
        %v963 = vmul.f32 %v962, %v961
        %v964 = vmul.f32 0.5, %v963
        %v965 = vsub.f32 1.5, %v964
        %v966 = vmul.f32 %v961, %v965
        %vm967 = vweird.f32 %v944
        %vm968 = vweird.f32 %v961
        %vm969 = vmor %vm967, %vm968
        %v970 = vsel %vm969, %v961, %v966
        %v971 = vrsqrt.pop %v945
        %v972 = vmul.f32 %v971, %v945
        %v973 = vmul.f32 %v972, %v971
        %v974 = vmul.f32 0.5, %v973
        %v975 = vsub.f32 1.5, %v974
        %v976 = vmul.f32 %v971, %v975
        %vm977 = vweird.f32 %v945
        %vm978 = vweird.f32 %v971
        %vm979 = vmor %vm977, %vm978
        %v980 = vsel %vm979, %v971, %v976
        %v981 = vrsqrt.pop %v946
        %v982 = vmul.f32 %v981, %v946
        %v983 = vmul.f32 %v982, %v981
        %v984 = vmul.f32 0.5, %v983
        %v985 = vsub.f32 1.5, %v984
        %v986 = vmul.f32 %v981, %v985
        %vm987 = vweird.f32 %v946
        %vm988 = vweird.f32 %v981
        %vm989 = vmor %vm987, %vm988
        %v990 = vsel %vm989, %v981, %v986
        %v991 = vrsqrt.pop %v947
        %v992 = vmul.f32 %v991, %v947
        %v993 = vmul.f32 %v992, %v991
        %v994 = vmul.f32 0.5, %v993
        %v995 = vsub.f32 1.5, %v994
        %v996 = vmul.f32 %v991, %v995
        %vm997 = vweird.f32 %v947
        %vm998 = vweird.f32 %v991
        %vm999 = vmor %vm997, %vm998
        %v1000 = vsel %vm999, %v991, %v996
        %v1001 = vrsqrt.pop %v948
        %v1002 = vmul.f32 %v1001, %v948
        %v1003 = vmul.f32 %v1002, %v1001
        %v1004 = vmul.f32 0.5, %v1003
        %v1005 = vsub.f32 1.5, %v1004
        %v1006 = vmul.f32 %v1001, %v1005
        %vm1007 = vweird.f32 %v948
        %vm1008 = vweird.f32 %v1001
        %vm1009 = vmor %vm1007, %vm1008
        %v1010 = vsel %vm1009, %v1001, %v1006
        %v1011 = vrsqrt.pop %v949
        %v1012 = vmul.f32 %v1011, %v949
        %v1013 = vmul.f32 %v1012, %v1011
        %v1014 = vmul.f32 0.5, %v1013
        %v1015 = vsub.f32 1.5, %v1014
        %v1016 = vmul.f32 %v1011, %v1015
        %vm1017 = vweird.f32 %v949
        %vm1018 = vweird.f32 %v1011
        %vm1019 = vmor %vm1017, %vm1018
        %v1020 = vsel %vm1019, %v1011, %v1016
        %v1021 = vrsqrt.pop %v950
        %v1022 = vmul.f32 %v1021, %v950
        %v1023 = vmul.f32 %v1022, %v1021
        %v1024 = vmul.f32 0.5, %v1023
        %v1025 = vsub.f32 1.5, %v1024
        %v1026 = vmul.f32 %v1021, %v1025
        %vm1027 = vweird.f32 %v950
        %vm1028 = vweird.f32 %v1021
        %vm1029 = vmor %vm1027, %vm1028
        %v1030 = vsel %vm1029, %v1021, %v1026
        %v1031 = vmul.f32 %v895, %v960
        %v1032 = vmul.f32 %v896, %v970
        %v1033 = vmul.f32 %v897, %v980
        %v1034 = vmul.f32 %v898, %v990
        %v1035 = vmul.f32 %v899, %v1000
        %v1036 = vmul.f32 %v900, %v1010
        %v1037 = vmul.f32 %v901, %v1020
        %v1038 = vmul.f32 %v902, %v1030
        %v1039 = vmul.f32 %v1031, %v836
        %v1040 = vmul.f32 %v1032, %v836
        %v1041 = vmul.f32 %v1033, %v836
        %v1042 = vmul.f32 %v1034, %v836
        %v1043 = vmul.f32 %v1035, %v836
        %v1044 = vmul.f32 %v1036, %v836
        %v1045 = vmul.f32 %v1037, %v836
        %v1046 = vmul.f32 %v1038, %v836
        %v1047 = vadd.f32 %v1039, %v850
        %v1048 = vadd.f32 %v1040, %v850
        %v1049 = vadd.f32 %v1041, %v850
        %v1050 = vadd.f32 %v1042, %v850
        %v1051 = vadd.f32 %v1043, %v850
        %v1052 = vadd.f32 %v1044, %v850
        %v1053 = vadd.f32 %v1045, %v850
        %v1054 = vadd.f32 %v1046, %v850
        %v1055 = vsub.f32 %v441, 1.0
        %v1056 = vsub.f32 %v442, 1.0
        %v1057 = vsub.f32 %v443, 1.0
        %v1058 = vsub.f32 %v444, 1.0
        %v1059 = vsub.f32 %v445, 1.0
        %v1060 = vsub.f32 %v446, 1.0
        %v1061 = vsub.f32 %v447, 1.0
        %v1062 = vsub.f32 %v448, 1.0
        %v1063 = vmul.f32 %v1055, 1e+30
        %v1064 = vmul.f32 %v1056, 1e+30
        %v1065 = vmul.f32 %v1057, 1e+30
        %v1066 = vmul.f32 %v1058, 1e+30
        %v1067 = vmul.f32 %v1059, 1e+30
        %v1068 = vmul.f32 %v1060, 1e+30
        %v1069 = vmul.f32 %v1061, 1e+30
        %v1070 = vmul.f32 %v1062, 1e+30
        %1072 = vset.pattern.permute.xlu0 0
        %1073 = vperm.xlu0 %1072, %v1063
        %v1074 = vpop.permute.xlu0 %1073
        %1077 = vset.pattern.permute.xlu0 0
        %1078 = vperm.xlu0 %1077, %v1064
        %v1079 = vpop.permute.xlu0 %1078
        %1082 = vset.pattern.permute.xlu0 0
        %1083 = vperm.xlu0 %1082, %v1065
        %v1084 = vpop.permute.xlu0 %1083
        %1087 = vset.pattern.permute.xlu0 0
        %1088 = vperm.xlu0 %1087, %v1066
        %v1089 = vpop.permute.xlu0 %1088
        %1092 = vset.pattern.permute.xlu0 0
        %1093 = vperm.xlu0 %1092, %v1067
        %v1094 = vpop.permute.xlu0 %1093
        %1097 = vset.pattern.permute.xlu0 0
        %1098 = vperm.xlu0 %1097, %v1068
        %v1099 = vpop.permute.xlu0 %1098
        %1102 = vset.pattern.permute.xlu0 0
        %1103 = vperm.xlu0 %1102, %v1069
        %v1104 = vpop.permute.xlu0 %1103
        %1107 = vset.pattern.permute.xlu0 0
        %1108 = vperm.xlu0 %1107, %v1070
        %v1109 = vpop.permute.xlu0 %1108
        %v1111 = vadd.f32 %v555, %v1074
        %v1112 = vadd.f32 %v558, %v1079
        %v1113 = vadd.f32 %v561, %v1084
        %v1114 = vadd.f32 %v564, %v1089
        %v1115 = vadd.f32 %v567, %v1094
        %v1116 = vadd.f32 %v570, %v1099
        %v1117 = vadd.f32 %v573, %v1104
        %v1118 = vadd.f32 %v576, %v1109
        %vm1119 = vcmask 654848
        %v1120 = vsel %vm1119, %v1111, -inf
        %v1121 = vsel %vm1119, %v1112, -inf
        %v1122 = vsel %vm1119, %v1113, -inf
        %v1123 = vsel %vm1119, %v1114, -inf
        %v1124 = vsel %vm1119, %v1115, -inf
        %v1125 = vmax.f32 %v1120, %v1124
        %v1126 = vsel %vm1119, %v1116, -inf
        %v1127 = vmax.f32 %v1121, %v1126
        %v1128 = vsel %vm1119, %v1117, -inf
        %v1129 = vmax.f32 %v1122, %v1128
        %v1130 = vsel %vm1119, %v1118, -inf
        %v1131 = vmax.f32 %v1123, %v1130
        %v1132 = vmax.f32 %v1125, %v1127
        %v1133 = vmax.f32 %v1129, %v1131
        %v1134 = vmax.f32 %v1132, %v1133
        %v1135 = vrot.slane %v1134, 4
        %v1136 = vmax.f32 %v1134, %v1135
        %v1137 = vrot.slane %v1136, 2
        %v1138 = vmax.f32 %v1136, %v1137
        %v1139 = vrot.slane %v1138, 1
        %v1140 = vmax.f32 %v1138, %v1139
        %v1141 = vsub.f32 %v1111, %v1140
        %v1142 = vsub.f32 %v1112, %v1140
        %v1143 = vsub.f32 %v1113, %v1140
        %v1144 = vsub.f32 %v1114, %v1140
        %v1145 = vsub.f32 %v1115, %v1140
        %v1146 = vsub.f32 %v1116, %v1140
        %v1147 = vsub.f32 %v1117, %v1140
        %v1148 = vsub.f32 %v1118, %v1140
        %v1149 = vmul.f32 %v1141, 1.442695
        %v1150 = vpow.pop %v1149
        %v1151 = vmul.f32 %v1142, 1.442695
        %v1152 = vpow.pop %v1151
        %v1153 = vmul.f32 %v1143, 1.442695
        %v1154 = vpow.pop %v1153
        %v1155 = vmul.f32 %v1144, 1.442695
        %v1156 = vpow.pop %v1155
        %v1157 = vmul.f32 %v1145, 1.442695
        %v1158 = vpow.pop %v1157
        %v1159 = vmul.f32 %v1146, 1.442695
        %v1160 = vpow.pop %v1159
        %v1161 = vmul.f32 %v1147, 1.442695
        %v1162 = vpow.pop %v1161
        %v1163 = vmul.f32 %v1148, 1.442695
        %v1164 = vpow.pop %v1163
        %v1165 = vsel %vm1119, %v1150, 0.0
        %v1166 = vsel %vm1119, %v1152, 0.0
        %v1167 = vadd.f32 %v1165, %v1166
        %v1168 = vsel %vm1119, %v1154, 0.0
        %v1169 = vadd.f32 %v1167, %v1168
        %v1170 = vsel %vm1119, %v1156, 0.0
        %v1171 = vadd.f32 %v1169, %v1170
        %v1172 = vsel %vm1119, %v1158, 0.0
        %v1173 = vadd.f32 %v1171, %v1172
        %v1174 = vsel %vm1119, %v1160, 0.0
        %v1175 = vadd.f32 %v1173, %v1174
        %v1176 = vsel %vm1119, %v1162, 0.0
        %v1177 = vadd.f32 %v1175, %v1176
        %v1178 = vsel %vm1119, %v1164, 0.0
        %v1179 = vadd.f32 %v1177, %v1178
        %v1180 = vrot.slane %v1179, 4
        %v1181 = vadd.f32 %v1179, %v1180
        %v1182 = vrot.slane %v1181, 2
        %v1183 = vadd.f32 %v1181, %v1182
        %v1184 = vrot.slane %v1183, 1
        %v1185 = vadd.f32 %v1183, %v1184
        %v1186 = vrcp.pop %v1185
        %v1187 = vmul.f32 %v1185, %v1186
        %v1188 = vsub.f32 1.0, %v1187
        %v1189 = vmul.f32 %v1186, %v1188
        %v1190 = vadd.f32 %v1186, %v1189
        %vm1191 = vweird.f32 %v1185
        %vm1192 = vweird.f32 %v1186
        %vm1193 = vmor %vm1191, %vm1192
        %v1194 = vsel %vm1193, %v1186, %v1190
        %v1195 = vand.u32 2147483647, %v1185
        %vm1196 = vcmp.eq.f32.partialorder %v1195, 8.507059e+37
        %v1197 = vand.u32 %v1185, 2147483648
        %v1198 = vor.u32 1.1754944e-38, %v1197
        %v1199 = vsel %vm1196, %v1198, %v1194
        %v1200 = vmul.f32 1.0, %v1199
        %v1201 = vmul.f32 %v1150, %v1200
        %v1202 = vmul.f32 %v1152, %v1200
        %v1203 = vmul.f32 %v1154, %v1200
        %v1204 = vmul.f32 %v1156, %v1200
        %v1205 = vmul.f32 %v1158, %v1200
        %v1206 = vmul.f32 %v1160, %v1200
        %v1207 = vmul.f32 %v1162, %v1200
        %v1208 = vmul.f32 %v1164, %v1200
        %1217 = vrot.lane.b32.xlu0 %v1201, 64
        %v1218 = vpop.permute.xlu0 %1217
        %1219 = vrot.lane.b32.xlu0 %v1202, 64
        %v1220 = vpop.permute.xlu0 %1219
        %1221 = vrot.lane.b32.xlu0 %v1203, 64
        %v1222 = vpop.permute.xlu0 %1221
        %1223 = vrot.lane.b32.xlu0 %v1204, 64
        %v1224 = vpop.permute.xlu0 %1223
        %1225 = vrot.lane.b32.xlu0 %v1205, 64
        %v1226 = vpop.permute.xlu0 %1225
        %1227 = vrot.lane.b32.xlu0 %v1206, 64
        %v1228 = vpop.permute.xlu0 %1227
        %1229 = vrot.lane.b32.xlu0 %v1207, 64
        %v1230 = vpop.permute.xlu0 %1229
        %1231 = vrot.lane.b32.xlu0 %v1208, 64
        %v1232 = vpop.permute.xlu0 %1231
        %1241 = vxpose.xlu0.b32.start [1/16] %v1218, 128
        %1242 = vxpose.xlu0.b32.cont [2/16] %v1220, 128
        %1243 = vxpose.xlu0.b32.cont [3/16] %v1222, 128
        %1244 = vxpose.xlu0.b32.cont [4/16] %v1224, 128
        %1245 = vxpose.xlu0.b32.cont [5/16] %v1226, 128
        %1246 = vxpose.xlu0.b32.cont [6/16] %v1228, 128
        %1247 = vxpose.xlu0.b32.cont [7/16] %v1230, 128
        %1248 = vxpose.xlu0.b32.cont [8/16] %v1232, 128
        %1249 = vxpose.xlu0.b32.cont [9/16] 0.0, 128
        %1250 = vxpose.xlu0.b32.cont [10/16] 0.0, 128
        %1251 = vxpose.xlu0.b32.cont [11/16] 0.0, 128
        %1252 = vxpose.xlu0.b32.cont [12/16] 0.0, 128
        %1253 = vxpose.xlu0.b32.cont [13/16] 0.0, 128
        %1254 = vxpose.xlu0.b32.cont [14/16] 0.0, 128
        %1255 = vxpose.xlu0.b32.cont [15/16] 0.0, 128
        %1256 = vxpose.xlu0.b32.end [16/16] 0.0, 128
        %v1257 = vpop.trf.xlu0
        %v1258 = vpop.trf.xlu0
        %v1259 = vpop.trf.xlu0
        %v1260 = vpop.trf.xlu0
        %v1261 = vpop.trf.xlu0
        %v1262 = vpop.trf.xlu0
        %v1263 = vpop.trf.xlu0
        %v1264 = vpop.trf.xlu0
        %v1265 = vpop.trf.xlu0
        %v1266 = vpop.trf.xlu0
        %v1267 = vpop.trf.xlu0
        %v1268 = vpop.trf.xlu0
        %v1269 = vpop.trf.xlu0
        %v1270 = vpop.trf.xlu0
        %v1271 = vpop.trf.xlu0
        %v1272 = vpop.trf.xlu0
        %1281 = vrot.lane.b32.xlu0 %v855, 64
        %v1282 = vpop.permute.xlu0 %1281
        %1283 = vrot.lane.b32.xlu0 %v856, 64
        %v1284 = vpop.permute.xlu0 %1283
        %1285 = vrot.lane.b32.xlu0 %v857, 64
        %v1286 = vpop.permute.xlu0 %1285
        %1287 = vrot.lane.b32.xlu0 %v858, 64
        %v1288 = vpop.permute.xlu0 %1287
        %1289 = vrot.lane.b32.xlu0 %v859, 64
        %v1290 = vpop.permute.xlu0 %1289
        %1291 = vrot.lane.b32.xlu0 %v860, 64
        %v1292 = vpop.permute.xlu0 %1291
        %1293 = vrot.lane.b32.xlu0 %v861, 64
        %v1294 = vpop.permute.xlu0 %1293
        %1295 = vrot.lane.b32.xlu0 %v862, 64
        %v1296 = vpop.permute.xlu0 %1295
        %v1306 = vsel %vm471, %v1257, 0
        %1308 = vmatpush.msra.mxu0 0.0
        %1309 = vmatpush.msra.mxu0 0.0
        %1310 = vmatpush.msra.mxu0 0.0
        %1311 = vmatpush.msra.mxu0 0.0
        %1312 = vmatpush.msra.mxu0 0.0
        %1313 = vmatpush.msra.mxu0 0.0
        %1314 = vmatpush.msra.mxu0 0.0
        %1315 = vmatpush.msra.mxu0 0.0
        %1316 = vmatpush.msra.mxu0 %v1296
        %1317 = vmatpush.msra.mxu0 %v1294
        %1318 = vmatpush.msra.mxu0 %v1292
        %1319 = vmatpush.msra.mxu0 %v1290
        %1320 = vmatpush.msra.mxu0 %v1288
        %1321 = vmatpush.msra.mxu0 %v1286
        %1322 = vmatpush.msra.mxu0 %v1284
        %1323 = vmatpush.msra.mxu0 %v1282
        %1324 = vmatmul.f32.gmra.mxu0 %v1306
        %v1325 = vpop.f32.mrf.mxu0
        %v1326 = vadd.f32 0.0, %v1325
        %1327 = vdwg.mxu0
        %1328 = vmatpush.msra.mxu0 0.0
        %1329 = vmatpush.msra.mxu0 0.0
        %1330 = vmatpush.msra.mxu0 0.0
        %1331 = vmatpush.msra.mxu0 0.0
        %1332 = vmatpush.msra.mxu0 0.0
        %1333 = vmatpush.msra.mxu0 0.0
        %1334 = vmatpush.msra.mxu0 0.0
        %1335 = vmatpush.msra.mxu0 0.0
        %1336 = vmatpush.msra.mxu0 %v1054
        %1337 = vmatpush.msra.mxu0 %v1053
        %1338 = vmatpush.msra.mxu0 %v1052
        %1339 = vmatpush.msra.mxu0 %v1051
        %1340 = vmatpush.msra.mxu0 %v1050
        %1341 = vmatpush.msra.mxu0 %v1049
        %1342 = vmatpush.msra.mxu0 %v1048
        %1343 = vmatpush.msra.mxu0 %v1047
        %1344 = vmatmul.f32.gmra.mxu0 %v1306
        %v1345 = vpop.f32.mrf.mxu0
        %v1346 = vadd.f32 0.0, %v1345
        %1347 = vdwg.mxu0
        %1348 = vrot.lane.b32.xlu0 %v1201, 56
        %v1349 = vpop.permute.xlu0 %1348
        %1350 = vrot.lane.b32.xlu0 %v1202, 56
        %v1351 = vpop.permute.xlu0 %1350
        %1352 = vrot.lane.b32.xlu0 %v1203, 56
        %v1353 = vpop.permute.xlu0 %1352
        %1354 = vrot.lane.b32.xlu0 %v1204, 56
        %v1355 = vpop.permute.xlu0 %1354
        %1356 = vrot.lane.b32.xlu0 %v1205, 56
        %v1357 = vpop.permute.xlu0 %1356
        %1358 = vrot.lane.b32.xlu0 %v1206, 56
        %v1359 = vpop.permute.xlu0 %1358
        %1360 = vrot.lane.b32.xlu0 %v1207, 56
        %v1361 = vpop.permute.xlu0 %1360
        %1362 = vrot.lane.b32.xlu0 %v1208, 56
        %v1363 = vpop.permute.xlu0 %1362
        %1372 = vxpose.xlu0.b32.start [1/16] %v1349, 128
        %1373 = vxpose.xlu0.b32.cont [2/16] %v1351, 128
        %1374 = vxpose.xlu0.b32.cont [3/16] %v1353, 128
        %1375 = vxpose.xlu0.b32.cont [4/16] %v1355, 128
        %1376 = vxpose.xlu0.b32.cont [5/16] %v1357, 128
        %1377 = vxpose.xlu0.b32.cont [6/16] %v1359, 128
        %1378 = vxpose.xlu0.b32.cont [7/16] %v1361, 128
        %1379 = vxpose.xlu0.b32.cont [8/16] %v1363, 128
        %1380 = vxpose.xlu0.b32.cont [9/16] 0.0, 128
        %1381 = vxpose.xlu0.b32.cont [10/16] 0.0, 128
        %1382 = vxpose.xlu0.b32.cont [11/16] 0.0, 128
        %1383 = vxpose.xlu0.b32.cont [12/16] 0.0, 128
        %1384 = vxpose.xlu0.b32.cont [13/16] 0.0, 128
        %1385 = vxpose.xlu0.b32.cont [14/16] 0.0, 128
        %1386 = vxpose.xlu0.b32.cont [15/16] 0.0, 128
        %1387 = vxpose.xlu0.b32.end [16/16] 0.0, 128
        %v1388 = vpop.trf.xlu0
        %v1389 = vpop.trf.xlu0
        %v1390 = vpop.trf.xlu0
        %v1391 = vpop.trf.xlu0
        %v1392 = vpop.trf.xlu0
        %v1393 = vpop.trf.xlu0
        %v1394 = vpop.trf.xlu0
        %v1395 = vpop.trf.xlu0
        %v1396 = vpop.trf.xlu0
        %v1397 = vpop.trf.xlu0
        %v1398 = vpop.trf.xlu0
        %v1399 = vpop.trf.xlu0
        %v1400 = vpop.trf.xlu0
        %v1401 = vpop.trf.xlu0
        %v1402 = vpop.trf.xlu0
        %v1403 = vpop.trf.xlu0
        %1404 = vrot.lane.b32.xlu0 %v855, 32
        %v1405 = vpop.permute.xlu0 %1404
        %1406 = vrot.lane.b32.xlu0 %v856, 32
        %v1407 = vpop.permute.xlu0 %1406
        %1408 = vrot.lane.b32.xlu0 %v857, 32
        %v1409 = vpop.permute.xlu0 %1408
        %1410 = vrot.lane.b32.xlu0 %v858, 32
        %v1411 = vpop.permute.xlu0 %1410
        %1412 = vrot.lane.b32.xlu0 %v859, 32
        %v1413 = vpop.permute.xlu0 %1412
        %1414 = vrot.lane.b32.xlu0 %v860, 32
        %v1415 = vpop.permute.xlu0 %1414
        %1416 = vrot.lane.b32.xlu0 %v861, 32
        %v1417 = vpop.permute.xlu0 %1416
        %1418 = vrot.lane.b32.xlu0 %v862, 32
        %v1419 = vpop.permute.xlu0 %1418
        %v1429 = vsel %vm471, %v1388, 0
        %1431 = vmatpush.msra.mxu0 0.0
        %1432 = vmatpush.msra.mxu0 0.0
        %1433 = vmatpush.msra.mxu0 0.0
        %1434 = vmatpush.msra.mxu0 0.0
        %1435 = vmatpush.msra.mxu0 0.0
        %1436 = vmatpush.msra.mxu0 0.0
        %1437 = vmatpush.msra.mxu0 0.0
        %1438 = vmatpush.msra.mxu0 0.0
        %1439 = vmatpush.msra.mxu0 %v1419
        %1440 = vmatpush.msra.mxu0 %v1417
        %1441 = vmatpush.msra.mxu0 %v1415
        %1442 = vmatpush.msra.mxu0 %v1413
        %1443 = vmatpush.msra.mxu0 %v1411
        %1444 = vmatpush.msra.mxu0 %v1409
        %1445 = vmatpush.msra.mxu0 %v1407
        %1446 = vmatpush.msra.mxu0 %v1405
        %1447 = vmatmul.f32.gmra.mxu0 %v1429
        %v1448 = vpop.f32.mrf.mxu0
        %v1449 = vadd.f32 0.0, %v1448
        %1450 = vdwg.mxu0
        %1459 = vrot.lane.b32.xlu0 %v1047, 96
        %v1460 = vpop.permute.xlu0 %1459
        %1461 = vrot.lane.b32.xlu0 %v1048, 96
        %v1462 = vpop.permute.xlu0 %1461
        %1463 = vrot.lane.b32.xlu0 %v1049, 96
        %v1464 = vpop.permute.xlu0 %1463
        %1465 = vrot.lane.b32.xlu0 %v1050, 96
        %v1466 = vpop.permute.xlu0 %1465
        %1467 = vrot.lane.b32.xlu0 %v1051, 96
        %v1468 = vpop.permute.xlu0 %1467
        %1469 = vrot.lane.b32.xlu0 %v1052, 96
        %v1470 = vpop.permute.xlu0 %1469
        %1471 = vrot.lane.b32.xlu0 %v1053, 96
        %v1472 = vpop.permute.xlu0 %1471
        %1473 = vrot.lane.b32.xlu0 %v1054, 96
        %v1474 = vpop.permute.xlu0 %1473
        %1483 = vmatpush.msra.mxu0 0.0
        %1484 = vmatpush.msra.mxu0 0.0
        %1485 = vmatpush.msra.mxu0 0.0
        %1486 = vmatpush.msra.mxu0 0.0
        %1487 = vmatpush.msra.mxu0 0.0
        %1488 = vmatpush.msra.mxu0 0.0
        %1489 = vmatpush.msra.mxu0 0.0
        %1490 = vmatpush.msra.mxu0 0.0
        %1491 = vmatpush.msra.mxu0 %v1474
        %1492 = vmatpush.msra.mxu0 %v1472
        %1493 = vmatpush.msra.mxu0 %v1470
        %1494 = vmatpush.msra.mxu0 %v1468
        %1495 = vmatpush.msra.mxu0 %v1466
        %1496 = vmatpush.msra.mxu0 %v1464
        %1497 = vmatpush.msra.mxu0 %v1462
        %1498 = vmatpush.msra.mxu0 %v1460
        %1499 = vmatmul.f32.gmra.mxu0 %v1429
        %v1500 = vpop.f32.mrf.mxu0
        %v1501 = vadd.f32 0.0, %v1500
        %1502 = vdwg.mxu0
        %v1503 = vld [vmem:[%s7] sm:$0x1]
        %v1504 = vld [vmem:[%s8] sm:$0x1]
        %vm1505 = vcmask 261120
        %v1506 = vsel %vm1505, %v1326, 0.0
        %1507 = vadd.xlane.f32.xlu0 %v1506
        %v1508 = vpop.xlane.xlu0 %1507
        %v1509 = vadd.f32 %v1508, 0.0
        %v1510 = vsel %vm1505, %v1449, 0.0
        %1511 = vadd.xlane.f32.xlu0 %v1510
        %v1512 = vpop.xlane.xlu0 %1511
        %v1513 = vadd.f32 %v1509, %v1512
        %v1514 = vmul.f32 %v1513, %v650
        %v1515 = vsub.f32 %v1326, %v1514
        %v1516 = vmul.f32 %v1515, %v1515
        %v1517 = vsel %vm1505, %v1516, 0.0
        %1518 = vadd.xlane.f32.xlu0 %v1517
        %v1519 = vpop.xlane.xlu0 %1518
        %v1520 = vadd.f32 %v1519, 0.0
        %v1521 = vsub.f32 %v1449, %v1514
        %v1522 = vmul.f32 %v1521, %v1521
        %v1523 = vsel %vm1505, %v1522, 0.0
        %1524 = vadd.xlane.f32.xlu0 %v1523
        %v1525 = vpop.xlane.xlu0 %1524
        %v1526 = vadd.f32 %v1520, %v1525
        %v1527 = vmul.f32 %v1526, %v650
        %v1528 = vadd.f32 %v1527, 1e-05
        %v1529 = vrsqrt.pop %v1528
        %v1530 = vmul.f32 %v1529, %v1528
        %v1531 = vmul.f32 %v1530, %v1529
        %v1532 = vmul.f32 0.5, %v1531
        %v1533 = vsub.f32 1.5, %v1532
        %v1534 = vmul.f32 %v1529, %v1533
        %vm1535 = vweird.f32 %v1528
        %vm1536 = vweird.f32 %v1529
        %vm1537 = vmor %vm1535, %vm1536
        %v1538 = vsel %vm1537, %v1529, %v1534
        %v1539 = vmul.f32 %v1515, %v1538
        %v1541 = vperm.slane %v1503, 0
        %v1543 = vmul.f32 %v1539, %v1541
        %v1545 = vperm.slane %v1504, 0
        %v1547 = vadd.f32 %v1543, %v1545
        %v1548 = vmul.f32 %v1521, %v1538
        %1549 = vrot.lane.b32.xlu0 %v1541, 96
        %v1550 = vpop.permute.xlu0 %1549
        %v1552 = vmul.f32 %v1548, %v1550
        %1553 = vrot.lane.b32.xlu0 %v1545, 96
        %v1554 = vpop.permute.xlu0 %1553
        %v1556 = vadd.f32 %v1552, %v1554
        %v1557 = vsel %vm1505, %v1346, 0.0
        %1558 = vadd.xlane.f32.xlu0 %v1557
        %v1559 = vpop.xlane.xlu0 %1558
        %v1560 = vadd.f32 %v1559, 0.0
        %v1561 = vsel %vm1505, %v1501, 0.0
        %1562 = vadd.xlane.f32.xlu0 %v1561
        %v1563 = vpop.xlane.xlu0 %1562
        %v1564 = vadd.f32 %v1560, %v1563
        %v1565 = vmul.f32 %v1564, %v650
        %v1566 = vsub.f32 %v1346, %v1565
        %v1567 = vmul.f32 %v1566, %v1566
        %v1568 = vsel %vm1505, %v1567, 0.0
        %1569 = vadd.xlane.f32.xlu0 %v1568
        %v1570 = vpop.xlane.xlu0 %1569
        %v1571 = vadd.f32 %v1570, 0.0
        %v1572 = vsub.f32 %v1501, %v1565
        %v1573 = vmul.f32 %v1572, %v1572
        %v1574 = vsel %vm1505, %v1573, 0.0
        %1575 = vadd.xlane.f32.xlu0 %v1574
        %v1576 = vpop.xlane.xlu0 %1575
        %v1577 = vadd.f32 %v1571, %v1576
        %v1578 = vmul.f32 %v1577, %v650
        %v1579 = vadd.f32 %v1578, 1e-05
        %v1580 = vrsqrt.pop %v1579
        %v1581 = vmul.f32 %v1580, %v1579
        %v1582 = vmul.f32 %v1581, %v1580
        %v1583 = vmul.f32 0.5, %v1582
        %v1584 = vsub.f32 1.5, %v1583
        %v1585 = vmul.f32 %v1580, %v1584
        %vm1586 = vweird.f32 %v1579
        %vm1587 = vweird.f32 %v1580
        %vm1588 = vmor %vm1586, %vm1587
        %v1589 = vsel %vm1588, %v1580, %v1585
        %v1590 = vmul.f32 %v1566, %v1589
        %v1591 = vmul.f32 %v1590, %v1541
        %v1592 = vadd.f32 %v1591, %v1545
        %v1593 = vmul.f32 %v1572, %v1589
        %v1594 = vmul.f32 %v1593, %v1550
        %v1595 = vadd.f32 %v1594, %v1554
        %v1597 = vsel %vm1505, %v578, 0
        %v1600 = vsel %vm1505, %v579, 0
        %v1603 = vsel %vm1505, %v580, 0
        %v1606 = vsel %vm1505, %v581, 0
        %v1609 = vsel %vm1505, %v582, 0
        %v1612 = vsel %vm1505, %v583, 0
        %v1615 = vsel %vm1505, %v584, 0
        %v1618 = vsel %vm1505, %v585, 0
        %v1621 = vsel %vm1505, %v1547, 0
        %v1623 = vsel %vm1505, %v1282, 0
        %v1625 = vsel %vm1505, %v1284, 0
        %v1627 = vsel %vm1505, %v1286, 0
        %v1629 = vsel %vm1505, %v1288, 0
        %v1631 = vsel %vm1505, %v1290, 0
        %v1633 = vsel %vm1505, %v1292, 0
        %v1635 = vsel %vm1505, %v1294, 0
        %v1637 = vsel %vm1505, %v1296, 0
        %1639 = vmatpush.xpose.msra.mxu0 0.0
        %1640 = vmatpush.xpose.msra.mxu0 0.0
        %1641 = vmatpush.xpose.msra.mxu0 0.0
        %1642 = vmatpush.xpose.msra.mxu0 0.0
        %1643 = vmatpush.xpose.msra.mxu0 0.0
        %1644 = vmatpush.xpose.msra.mxu0 0.0
        %1645 = vmatpush.xpose.msra.mxu0 0.0
        %1646 = vmatpush.xpose.msra.mxu0 %v1637
        %1647 = vmatpush.xpose.msra.mxu0 %v1635
        %1648 = vmatpush.xpose.msra.mxu0 %v1633
        %1649 = vmatpush.xpose.msra.mxu0 %v1631
        %1650 = vmatpush.xpose.msra.mxu0 %v1629
        %1651 = vmatpush.xpose.msra.mxu0 %v1627
        %1652 = vmatpush.xpose.msra.mxu0 %v1625
        %1653 = vmatpush.xpose.msra.mxu0 %v1623
        %1654 = vmatpush.xpose.msra.mxu0 %v1621
        %1655 = vmatmul.f32.gmra.mxu0 %v1597
        %v1656 = vpop.f32.mrf.mxu0
        %v1657 = vadd.f32 %v433, %v1656
        %1658 = vmatmul.f32.gmra.mxu0 %v1600
        %v1659 = vpop.f32.mrf.mxu0
        %v1660 = vadd.f32 %v434, %v1659
        %1661 = vmatmul.f32.gmra.mxu0 %v1603
        %v1662 = vpop.f32.mrf.mxu0
        %v1663 = vadd.f32 %v435, %v1662
        %1664 = vmatmul.f32.gmra.mxu0 %v1606
        %v1665 = vpop.f32.mrf.mxu0
        %v1666 = vadd.f32 %v436, %v1665
        %1667 = vmatmul.f32.gmra.mxu0 %v1609
        %v1668 = vpop.f32.mrf.mxu0
        %v1669 = vadd.f32 %v437, %v1668
        %1670 = vmatmul.f32.gmra.mxu0 %v1612
        %v1671 = vpop.f32.mrf.mxu0
        %v1672 = vadd.f32 %v438, %v1671
        %1673 = vmatmul.f32.gmra.mxu0 %v1615
        %v1674 = vpop.f32.mrf.mxu0
        %v1675 = vadd.f32 %v439, %v1674
        %1676 = vmatmul.f32.gmra.mxu0 %v1618
        %v1677 = vpop.f32.mrf.mxu0
        %v1678 = vadd.f32 %v440, %v1677
        %1679 = vdwg.mxu0
        %vm1680 = vcmask 588800
        %v1681 = vsel %vm1680, %v1657, -inf
        %1682 = vmax.xlane.f32.xlu0 %v1681
        %v1683 = vpop.xlane.xlu0 %1682
        %v1684 = vsel %vm1680, %v1660, -inf
        %1685 = vmax.xlane.f32.xlu0 %v1684
        %v1686 = vpop.xlane.xlu0 %1685
        %v1687 = vsel %vm1680, %v1663, -inf
        %1688 = vmax.xlane.f32.xlu0 %v1687
        %v1689 = vpop.xlane.xlu0 %1688
        %v1690 = vsel %vm1680, %v1666, -inf
        %1691 = vmax.xlane.f32.xlu0 %v1690
        %v1692 = vpop.xlane.xlu0 %1691
        %v1693 = vsel %vm1680, %v1669, -inf
        %1694 = vmax.xlane.f32.xlu0 %v1693
        %v1695 = vpop.xlane.xlu0 %1694
        %v1696 = vsel %vm1680, %v1672, -inf
        %1697 = vmax.xlane.f32.xlu0 %v1696
        %v1698 = vpop.xlane.xlu0 %1697
        %v1699 = vsel %vm1680, %v1675, -inf
        %1700 = vmax.xlane.f32.xlu0 %v1699
        %v1701 = vpop.xlane.xlu0 %1700
        %v1702 = vsel %vm1680, %v1678, -inf
        %1703 = vmax.xlane.f32.xlu0 %v1702
        %v1704 = vpop.xlane.xlu0 %1703
        %v1705 = vsub.f32 %v1657, %v1683
        %v1706 = vsub.f32 %v1660, %v1686
        %v1707 = vsub.f32 %v1663, %v1689
        %v1708 = vsub.f32 %v1666, %v1692
        %v1709 = vsub.f32 %v1669, %v1695
        %v1710 = vsub.f32 %v1672, %v1698
        %v1711 = vsub.f32 %v1675, %v1701
        %v1712 = vsub.f32 %v1678, %v1704
        %v1713 = vmul.f32 %v1705, 1.442695
        %v1714 = vpow.pop %v1713
        %v1715 = vmul.f32 %v1706, 1.442695
        %v1716 = vpow.pop %v1715
        %v1717 = vmul.f32 %v1707, 1.442695
        %v1718 = vpow.pop %v1717
        %v1719 = vmul.f32 %v1708, 1.442695
        %v1720 = vpow.pop %v1719
        %v1721 = vmul.f32 %v1709, 1.442695
        %v1722 = vpow.pop %v1721
        %v1723 = vmul.f32 %v1710, 1.442695
        %v1724 = vpow.pop %v1723
        %v1725 = vmul.f32 %v1711, 1.442695
        %v1726 = vpow.pop %v1725
        %v1727 = vmul.f32 %v1712, 1.442695
        %v1728 = vpow.pop %v1727
        %v1729 = vsel %vm1680, %v1714, 0.0
        %1730 = vadd.xlane.f32.xlu0 %v1729
        %v1731 = vpop.xlane.xlu0 %1730
        %v1732 = vsel %vm1680, %v1716, 0.0
        %1733 = vadd.xlane.f32.xlu0 %v1732
        %v1734 = vpop.xlane.xlu0 %1733
        %v1735 = vsel %vm1680, %v1718, 0.0
        %1736 = vadd.xlane.f32.xlu0 %v1735
        %v1737 = vpop.xlane.xlu0 %1736
        %v1738 = vsel %vm1680, %v1720, 0.0
        %1739 = vadd.xlane.f32.xlu0 %v1738
        %v1740 = vpop.xlane.xlu0 %1739
        %v1741 = vsel %vm1680, %v1722, 0.0
        %1742 = vadd.xlane.f32.xlu0 %v1741
        %v1743 = vpop.xlane.xlu0 %1742
        %v1744 = vsel %vm1680, %v1724, 0.0
        %1745 = vadd.xlane.f32.xlu0 %v1744
        %v1746 = vpop.xlane.xlu0 %1745
        %v1747 = vsel %vm1680, %v1726, 0.0
        %1748 = vadd.xlane.f32.xlu0 %v1747
        %v1749 = vpop.xlane.xlu0 %1748
        %v1750 = vsel %vm1680, %v1728, 0.0
        %1751 = vadd.xlane.f32.xlu0 %v1750
        %v1752 = vpop.xlane.xlu0 %1751
        %v1753 = vrcp.pop %v1731
        %v1754 = vmul.f32 %v1731, %v1753
        %v1755 = vsub.f32 1.0, %v1754
        %v1756 = vmul.f32 %v1753, %v1755
        %v1757 = vadd.f32 %v1753, %v1756
        %vm1758 = vweird.f32 %v1731
        %vm1759 = vweird.f32 %v1753
        %vm1760 = vmor %vm1758, %vm1759
        %v1761 = vsel %vm1760, %v1753, %v1757
        %v1762 = vand.u32 2147483647, %v1731
        %vm1763 = vcmp.eq.f32.partialorder %v1762, 8.507059e+37
        %v1764 = vand.u32 %v1731, 2147483648
        %v1765 = vor.u32 1.1754944e-38, %v1764
        %v1766 = vsel %vm1763, %v1765, %v1761
        %v1767 = vmul.f32 1.0, %v1766
        %v1768 = vrcp.pop %v1734
        %v1769 = vmul.f32 %v1734, %v1768
        %v1770 = vsub.f32 1.0, %v1769
        %v1771 = vmul.f32 %v1768, %v1770
        %v1772 = vadd.f32 %v1768, %v1771
        %vm1773 = vweird.f32 %v1734
        %vm1774 = vweird.f32 %v1768
        %vm1775 = vmor %vm1773, %vm1774
        %v1776 = vsel %vm1775, %v1768, %v1772
        %v1777 = vand.u32 2147483647, %v1734
        %vm1778 = vcmp.eq.f32.partialorder %v1777, 8.507059e+37
        %v1779 = vand.u32 %v1734, 2147483648
        %v1780 = vor.u32 1.1754944e-38, %v1779
        %v1781 = vsel %vm1778, %v1780, %v1776
        %v1782 = vmul.f32 1.0, %v1781
        %v1783 = vrcp.pop %v1737
        %v1784 = vmul.f32 %v1737, %v1783
        %v1785 = vsub.f32 1.0, %v1784
        %v1786 = vmul.f32 %v1783, %v1785
        %v1787 = vadd.f32 %v1783, %v1786
        %vm1788 = vweird.f32 %v1737
        %vm1789 = vweird.f32 %v1783
        %vm1790 = vmor %vm1788, %vm1789
        %v1791 = vsel %vm1790, %v1783, %v1787
        %v1792 = vand.u32 2147483647, %v1737
        %vm1793 = vcmp.eq.f32.partialorder %v1792, 8.507059e+37
        %v1794 = vand.u32 %v1737, 2147483648
        %v1795 = vor.u32 1.1754944e-38, %v1794
        %v1796 = vsel %vm1793, %v1795, %v1791
        %v1797 = vmul.f32 1.0, %v1796
        %v1798 = vrcp.pop %v1740
        %v1799 = vmul.f32 %v1740, %v1798
        %v1800 = vsub.f32 1.0, %v1799
        %v1801 = vmul.f32 %v1798, %v1800
        %v1802 = vadd.f32 %v1798, %v1801
        %vm1803 = vweird.f32 %v1740
        %vm1804 = vweird.f32 %v1798
        %vm1805 = vmor %vm1803, %vm1804
        %v1806 = vsel %vm1805, %v1798, %v1802
        %v1807 = vand.u32 2147483647, %v1740
        %vm1808 = vcmp.eq.f32.partialorder %v1807, 8.507059e+37
        %v1809 = vand.u32 %v1740, 2147483648
        %v1810 = vor.u32 1.1754944e-38, %v1809
        %v1811 = vsel %vm1808, %v1810, %v1806
        %v1812 = vmul.f32 1.0, %v1811
        %v1813 = vrcp.pop %v1743
        %v1814 = vmul.f32 %v1743, %v1813
        %v1815 = vsub.f32 1.0, %v1814
        %v1816 = vmul.f32 %v1813, %v1815
        %v1817 = vadd.f32 %v1813, %v1816
        %vm1818 = vweird.f32 %v1743
        %vm1819 = vweird.f32 %v1813
        %vm1820 = vmor %vm1818, %vm1819
        %v1821 = vsel %vm1820, %v1813, %v1817
        %v1822 = vand.u32 2147483647, %v1743
        %vm1823 = vcmp.eq.f32.partialorder %v1822, 8.507059e+37
        %v1824 = vand.u32 %v1743, 2147483648
        %v1825 = vor.u32 1.1754944e-38, %v1824
        %v1826 = vsel %vm1823, %v1825, %v1821
        %v1827 = vmul.f32 1.0, %v1826
        %v1828 = vrcp.pop %v1746
        %v1829 = vmul.f32 %v1746, %v1828
        %v1830 = vsub.f32 1.0, %v1829
        %v1831 = vmul.f32 %v1828, %v1830
        %v1832 = vadd.f32 %v1828, %v1831
        %vm1833 = vweird.f32 %v1746
        %vm1834 = vweird.f32 %v1828
        %vm1835 = vmor %vm1833, %vm1834
        %v1836 = vsel %vm1835, %v1828, %v1832
        %v1837 = vand.u32 2147483647, %v1746
        %vm1838 = vcmp.eq.f32.partialorder %v1837, 8.507059e+37
        %v1839 = vand.u32 %v1746, 2147483648
        %v1840 = vor.u32 1.1754944e-38, %v1839
        %v1841 = vsel %vm1838, %v1840, %v1836
        %v1842 = vmul.f32 1.0, %v1841
        %v1843 = vrcp.pop %v1749
        %v1844 = vmul.f32 %v1749, %v1843
        %v1845 = vsub.f32 1.0, %v1844
        %v1846 = vmul.f32 %v1843, %v1845
        %v1847 = vadd.f32 %v1843, %v1846
        %vm1848 = vweird.f32 %v1749
        %vm1849 = vweird.f32 %v1843
        %vm1850 = vmor %vm1848, %vm1849
        %v1851 = vsel %vm1850, %v1843, %v1847
        %v1852 = vand.u32 2147483647, %v1749
        %vm1853 = vcmp.eq.f32.partialorder %v1852, 8.507059e+37
        %v1854 = vand.u32 %v1749, 2147483648
        %v1855 = vor.u32 1.1754944e-38, %v1854
        %v1856 = vsel %vm1853, %v1855, %v1851
        %v1857 = vmul.f32 1.0, %v1856
        %v1858 = vrcp.pop %v1752
        %v1859 = vmul.f32 %v1752, %v1858
        %v1860 = vsub.f32 1.0, %v1859
        %v1861 = vmul.f32 %v1858, %v1860
        %v1862 = vadd.f32 %v1858, %v1861
        %vm1863 = vweird.f32 %v1752
        %vm1864 = vweird.f32 %v1858
        %vm1865 = vmor %vm1863, %vm1864
        %v1866 = vsel %vm1865, %v1858, %v1862
        %v1867 = vand.u32 2147483647, %v1752
        %vm1868 = vcmp.eq.f32.partialorder %v1867, 8.507059e+37
        %v1869 = vand.u32 %v1752, 2147483648
        %v1870 = vor.u32 1.1754944e-38, %v1869
        %v1871 = vsel %vm1868, %v1870, %v1866
        %v1872 = vmul.f32 1.0, %v1871
        %v1873 = vmul.f32 %v1714, %v1767
        %v1874 = vmul.f32 %v1716, %v1782
        %v1875 = vmul.f32 %v1718, %v1797
        %v1876 = vmul.f32 %v1720, %v1812
        %v1877 = vmul.f32 %v1722, %v1827
        %v1878 = vmul.f32 %v1724, %v1842
        %v1879 = vmul.f32 %v1726, %v1857
        %v1880 = vmul.f32 %v1728, %v1872
        %v1882 = vsel %vm1680, %v1873, 0
        %v1885 = vsel %vm1680, %v1874, 0
        %v1888 = vsel %vm1680, %v1875, 0
        %v1891 = vsel %vm1680, %v1876, 0
        %v1894 = vsel %vm1680, %v1877, 0
        %v1897 = vsel %vm1680, %v1878, 0
        %v1900 = vsel %vm1680, %v1879, 0
        %v1903 = vsel %vm1680, %v1880, 0
        %1905 = vmatpush.msra.mxu0 0.0
        %1906 = vmatpush.msra.mxu0 0.0
        %1907 = vmatpush.msra.mxu0 0.0
        %1908 = vmatpush.msra.mxu0 0.0
        %1909 = vmatpush.msra.mxu0 0.0
        %1910 = vmatpush.msra.mxu0 0.0
        %1911 = vmatpush.msra.mxu0 0.0
        %1912 = vmatpush.msra.mxu0 %v1054
        %1913 = vmatpush.msra.mxu0 %v1053
        %1914 = vmatpush.msra.mxu0 %v1052
        %1915 = vmatpush.msra.mxu0 %v1051
        %1916 = vmatpush.msra.mxu0 %v1050
        %1917 = vmatpush.msra.mxu0 %v1049
        %1918 = vmatpush.msra.mxu0 %v1048
        %1919 = vmatpush.msra.mxu0 %v1047
        %1920 = vmatpush.msra.mxu0 %v1592
        %1921 = vmatmul.f32.gmra.mxu0 %v1882
        %v1922 = vpop.f32.mrf.mxu0
        %v1923 = vadd.f32 0.0, %v1922
        %1924 = vmatmul.f32.gmra.mxu0 %v1885
        %v1925 = vpop.f32.mrf.mxu0
        %v1926 = vadd.f32 0.0, %v1925
        %1927 = vmatmul.f32.gmra.mxu0 %v1888
        %v1928 = vpop.f32.mrf.mxu0
        %v1929 = vadd.f32 0.0, %v1928
        %1930 = vmatmul.f32.gmra.mxu0 %v1891
        %v1931 = vpop.f32.mrf.mxu0
        %v1932 = vadd.f32 0.0, %v1931
        %1933 = vmatmul.f32.gmra.mxu0 %v1894
        %v1934 = vpop.f32.mrf.mxu0
        %v1935 = vadd.f32 0.0, %v1934
        %1936 = vmatmul.f32.gmra.mxu0 %v1897
        %v1937 = vpop.f32.mrf.mxu0
        %v1938 = vadd.f32 0.0, %v1937
        %1939 = vmatmul.f32.gmra.mxu0 %v1900
        %v1940 = vpop.f32.mrf.mxu0
        %v1941 = vadd.f32 0.0, %v1940
        %1942 = vmatmul.f32.gmra.mxu0 %v1903
        %v1943 = vpop.f32.mrf.mxu0
        %v1944 = vadd.f32 0.0, %v1943
        %1945 = vdwg.mxu0
        %1947 = vset.pattern.permute.xlu0 0
        %1948 = vperm.xlu0 %1947, %v441
        %v1949 = vpop.permute.xlu0 %1948
        %1952 = vset.pattern.permute.xlu0 0
        %1953 = vperm.xlu0 %1952, %v442
        %v1954 = vpop.permute.xlu0 %1953
        %1957 = vset.pattern.permute.xlu0 0
        %1958 = vperm.xlu0 %1957, %v443
        %v1959 = vpop.permute.xlu0 %1958
        %1962 = vset.pattern.permute.xlu0 0
        %1963 = vperm.xlu0 %1962, %v444
        %v1964 = vpop.permute.xlu0 %1963
        %1967 = vset.pattern.permute.xlu0 0
        %1968 = vperm.xlu0 %1967, %v445
        %v1969 = vpop.permute.xlu0 %1968
        %1972 = vset.pattern.permute.xlu0 0
        %1973 = vperm.xlu0 %1972, %v446
        %v1974 = vpop.permute.xlu0 %1973
        %1977 = vset.pattern.permute.xlu0 0
        %1978 = vperm.xlu0 %1977, %v447
        %v1979 = vpop.permute.xlu0 %1978
        %1982 = vset.pattern.permute.xlu0 0
        %1983 = vperm.xlu0 %1982, %v448
        %v1984 = vpop.permute.xlu0 %1983
        %v1986 = vmul.f32 %v1923, %v1949
        %v1987 = vmul.f32 %v1926, %v1954
        %v1988 = vmul.f32 %v1929, %v1959
        %v1989 = vmul.f32 %v1932, %v1964
        %v1990 = vmul.f32 %v1935, %v1969
        %v1991 = vmul.f32 %v1938, %v1974
        %v1992 = vmul.f32 %v1941, %v1979
        %v1993 = vmul.f32 %v1944, %v1984
        %v1994 = vld [vmem:[%s9] sm:$0xff]
        %v1995 = vld [vmem:[%s9 + $0x8] sm:$0xff]
        %v1996 = vld [vmem:[%s9 + $0x10] sm:$0xff]
        %v1997 = vld [vmem:[%s9 + $0x18] sm:$0xff]
        %1998 = vrot.lane.b32.xlu0 %v578, 96
        %v1999 = vpop.permute.xlu0 %1998
        %2000 = vrot.lane.b32.xlu0 %v579, 96
        %v2001 = vpop.permute.xlu0 %2000
        %2002 = vrot.lane.b32.xlu0 %v580, 96
        %v2003 = vpop.permute.xlu0 %2002
        %2004 = vrot.lane.b32.xlu0 %v581, 96
        %v2005 = vpop.permute.xlu0 %2004
        %2006 = vrot.lane.b32.xlu0 %v582, 96
        %v2007 = vpop.permute.xlu0 %2006
        %2008 = vrot.lane.b32.xlu0 %v583, 96
        %v2009 = vpop.permute.xlu0 %2008
        %2010 = vrot.lane.b32.xlu0 %v584, 96
        %v2011 = vpop.permute.xlu0 %2010
        %2012 = vrot.lane.b32.xlu0 %v585, 96
        %v2013 = vpop.permute.xlu0 %2012
        %v2014 = vsel %vm1505, %v1999, 0
        %v2016 = vsel %vm1505, %v2001, 0
        %v2018 = vsel %vm1505, %v2003, 0
        %v2020 = vsel %vm1505, %v2005, 0
        %v2022 = vsel %vm1505, %v2007, 0
        %v2024 = vsel %vm1505, %v2009, 0
        %v2026 = vsel %vm1505, %v2011, 0
        %v2028 = vsel %vm1505, %v2013, 0
        %v2031 = vsel %vm1505, %v1556, 0
        %v2033 = vsel %vm1505, %v1405, 0
        %v2035 = vsel %vm1505, %v1407, 0
        %v2037 = vsel %vm1505, %v1409, 0
        %v2039 = vsel %vm1505, %v1411, 0
        %v2041 = vsel %vm1505, %v1413, 0
        %v2043 = vsel %vm1505, %v1415, 0
        %v2045 = vsel %vm1505, %v1417, 0
        %v2047 = vsel %vm1505, %v1419, 0
        %2049 = vmatpush.xpose.msra.mxu0 0.0
        %2050 = vmatpush.xpose.msra.mxu0 0.0
        %2051 = vmatpush.xpose.msra.mxu0 0.0
        %2052 = vmatpush.xpose.msra.mxu0 0.0
        %2053 = vmatpush.xpose.msra.mxu0 0.0
        %2054 = vmatpush.xpose.msra.mxu0 0.0
        %2055 = vmatpush.xpose.msra.mxu0 0.0
        %2056 = vmatpush.xpose.msra.mxu0 %v2047
        %2057 = vmatpush.xpose.msra.mxu0 %v2045
        %2058 = vmatpush.xpose.msra.mxu0 %v2043
        %2059 = vmatpush.xpose.msra.mxu0 %v2041
        %2060 = vmatpush.xpose.msra.mxu0 %v2039
        %2061 = vmatpush.xpose.msra.mxu0 %v2037
        %2062 = vmatpush.xpose.msra.mxu0 %v2035
        %2063 = vmatpush.xpose.msra.mxu0 %v2033
        %2064 = vmatpush.xpose.msra.mxu0 %v2031
        %2065 = vmatmul.f32.gmra.mxu0 %v2014
        %v2066 = vpop.f32.mrf.mxu0
        %v2067 = vadd.f32 %v433, %v2066
        %2068 = vmatmul.f32.gmra.mxu0 %v2016
        %v2069 = vpop.f32.mrf.mxu0
        %v2070 = vadd.f32 %v434, %v2069
        %2071 = vmatmul.f32.gmra.mxu0 %v2018
        %v2072 = vpop.f32.mrf.mxu0
        %v2073 = vadd.f32 %v435, %v2072
        %2074 = vmatmul.f32.gmra.mxu0 %v2020
        %v2075 = vpop.f32.mrf.mxu0
        %v2076 = vadd.f32 %v436, %v2075
        %2077 = vmatmul.f32.gmra.mxu0 %v2022
        %v2078 = vpop.f32.mrf.mxu0
        %v2079 = vadd.f32 %v437, %v2078
        %2080 = vmatmul.f32.gmra.mxu0 %v2024
        %v2081 = vpop.f32.mrf.mxu0
        %v2082 = vadd.f32 %v438, %v2081
        %2083 = vmatmul.f32.gmra.mxu0 %v2026
        %v2084 = vpop.f32.mrf.mxu0
        %v2085 = vadd.f32 %v439, %v2084
        %2086 = vmatmul.f32.gmra.mxu0 %v2028
        %v2087 = vpop.f32.mrf.mxu0
        %v2088 = vadd.f32 %v440, %v2087
        %2089 = vdwg.mxu0
        %v2090 = vsel %vm1680, %v2067, -inf
        %2091 = vmax.xlane.f32.xlu0 %v2090
        %v2092 = vpop.xlane.xlu0 %2091
        %v2093 = vsel %vm1680, %v2070, -inf
        %2094 = vmax.xlane.f32.xlu0 %v2093
        %v2095 = vpop.xlane.xlu0 %2094
        %v2096 = vsel %vm1680, %v2073, -inf
        %2097 = vmax.xlane.f32.xlu0 %v2096
        %v2098 = vpop.xlane.xlu0 %2097
        %v2099 = vsel %vm1680, %v2076, -inf
        %2100 = vmax.xlane.f32.xlu0 %v2099
        %v2101 = vpop.xlane.xlu0 %2100
        %v2102 = vsel %vm1680, %v2079, -inf
        %2103 = vmax.xlane.f32.xlu0 %v2102
        %v2104 = vpop.xlane.xlu0 %2103
        %v2105 = vsel %vm1680, %v2082, -inf
        %2106 = vmax.xlane.f32.xlu0 %v2105
        %v2107 = vpop.xlane.xlu0 %2106
        %v2108 = vsel %vm1680, %v2085, -inf
        %2109 = vmax.xlane.f32.xlu0 %v2108
        %v2110 = vpop.xlane.xlu0 %2109
        %v2111 = vsel %vm1680, %v2088, -inf
        %2112 = vmax.xlane.f32.xlu0 %v2111
        %v2113 = vpop.xlane.xlu0 %2112
        %v2114 = vsub.f32 %v2067, %v2092
        %v2115 = vsub.f32 %v2070, %v2095
        %v2116 = vsub.f32 %v2073, %v2098
        %v2117 = vsub.f32 %v2076, %v2101
        %v2118 = vsub.f32 %v2079, %v2104
        %v2119 = vsub.f32 %v2082, %v2107
        %v2120 = vsub.f32 %v2085, %v2110
        %v2121 = vsub.f32 %v2088, %v2113
        %v2122 = vmul.f32 %v2114, 1.442695
        %v2123 = vpow.pop %v2122
        %v2124 = vmul.f32 %v2115, 1.442695
        %v2125 = vpow.pop %v2124
        %v2126 = vmul.f32 %v2116, 1.442695
        %v2127 = vpow.pop %v2126
        %v2128 = vmul.f32 %v2117, 1.442695
        %v2129 = vpow.pop %v2128
        %v2130 = vmul.f32 %v2118, 1.442695
        %v2131 = vpow.pop %v2130
        %v2132 = vmul.f32 %v2119, 1.442695
        %v2133 = vpow.pop %v2132
        %v2134 = vmul.f32 %v2120, 1.442695
        %v2135 = vpow.pop %v2134
        %v2136 = vmul.f32 %v2121, 1.442695
        %v2137 = vpow.pop %v2136
        %v2138 = vsel %vm1680, %v2123, 0.0
        %2139 = vadd.xlane.f32.xlu0 %v2138
        %v2140 = vpop.xlane.xlu0 %2139
        %v2141 = vsel %vm1680, %v2125, 0.0
        %2142 = vadd.xlane.f32.xlu0 %v2141
        %v2143 = vpop.xlane.xlu0 %2142
        %v2144 = vsel %vm1680, %v2127, 0.0
        %2145 = vadd.xlane.f32.xlu0 %v2144
        %v2146 = vpop.xlane.xlu0 %2145
        %v2147 = vsel %vm1680, %v2129, 0.0
        %2148 = vadd.xlane.f32.xlu0 %v2147
        %v2149 = vpop.xlane.xlu0 %2148
        %v2150 = vsel %vm1680, %v2131, 0.0
        %2151 = vadd.xlane.f32.xlu0 %v2150
        %v2152 = vpop.xlane.xlu0 %2151
        %v2153 = vsel %vm1680, %v2133, 0.0
        %2154 = vadd.xlane.f32.xlu0 %v2153
        %v2155 = vpop.xlane.xlu0 %2154
        %v2156 = vsel %vm1680, %v2135, 0.0
        %2157 = vadd.xlane.f32.xlu0 %v2156
        %v2158 = vpop.xlane.xlu0 %2157
        %v2159 = vsel %vm1680, %v2137, 0.0
        %2160 = vadd.xlane.f32.xlu0 %v2159
        %v2161 = vpop.xlane.xlu0 %2160
        %v2162 = vrcp.pop %v2140
        %v2163 = vmul.f32 %v2140, %v2162
        %v2164 = vsub.f32 1.0, %v2163
        %v2165 = vmul.f32 %v2162, %v2164
        %v2166 = vadd.f32 %v2162, %v2165
        %vm2167 = vweird.f32 %v2140
        %vm2168 = vweird.f32 %v2162
        %vm2169 = vmor %vm2167, %vm2168
        %v2170 = vsel %vm2169, %v2162, %v2166
        %v2171 = vand.u32 2147483647, %v2140
        %vm2172 = vcmp.eq.f32.partialorder %v2171, 8.507059e+37
        %v2173 = vand.u32 %v2140, 2147483648
        %v2174 = vor.u32 1.1754944e-38, %v2173
        %v2175 = vsel %vm2172, %v2174, %v2170
        %v2176 = vmul.f32 1.0, %v2175
        %v2177 = vrcp.pop %v2143
        %v2178 = vmul.f32 %v2143, %v2177
        %v2179 = vsub.f32 1.0, %v2178
        %v2180 = vmul.f32 %v2177, %v2179
        %v2181 = vadd.f32 %v2177, %v2180
        %vm2182 = vweird.f32 %v2143
        %vm2183 = vweird.f32 %v2177
        %vm2184 = vmor %vm2182, %vm2183
        %v2185 = vsel %vm2184, %v2177, %v2181
        %v2186 = vand.u32 2147483647, %v2143
        %vm2187 = vcmp.eq.f32.partialorder %v2186, 8.507059e+37
        %v2188 = vand.u32 %v2143, 2147483648
        %v2189 = vor.u32 1.1754944e-38, %v2188
        %v2190 = vsel %vm2187, %v2189, %v2185
        %v2191 = vmul.f32 1.0, %v2190
        %v2192 = vrcp.pop %v2146
        %v2193 = vmul.f32 %v2146, %v2192
        %v2194 = vsub.f32 1.0, %v2193
        %v2195 = vmul.f32 %v2192, %v2194
        %v2196 = vadd.f32 %v2192, %v2195
        %vm2197 = vweird.f32 %v2146
        %vm2198 = vweird.f32 %v2192
        %vm2199 = vmor %vm2197, %vm2198
        %v2200 = vsel %vm2199, %v2192, %v2196
        %v2201 = vand.u32 2147483647, %v2146
        %vm2202 = vcmp.eq.f32.partialorder %v2201, 8.507059e+37
        %v2203 = vand.u32 %v2146, 2147483648
        %v2204 = vor.u32 1.1754944e-38, %v2203
        %v2205 = vsel %vm2202, %v2204, %v2200
        %v2206 = vmul.f32 1.0, %v2205
        %v2207 = vrcp.pop %v2149
        %v2208 = vmul.f32 %v2149, %v2207
        %v2209 = vsub.f32 1.0, %v2208
        %v2210 = vmul.f32 %v2207, %v2209
        %v2211 = vadd.f32 %v2207, %v2210
        %vm2212 = vweird.f32 %v2149
        %vm2213 = vweird.f32 %v2207
        %vm2214 = vmor %vm2212, %vm2213
        %v2215 = vsel %vm2214, %v2207, %v2211
        %v2216 = vand.u32 2147483647, %v2149
        %vm2217 = vcmp.eq.f32.partialorder %v2216, 8.507059e+37
        %v2218 = vand.u32 %v2149, 2147483648
        %v2219 = vor.u32 1.1754944e-38, %v2218
        %v2220 = vsel %vm2217, %v2219, %v2215
        %v2221 = vmul.f32 1.0, %v2220
        %v2222 = vrcp.pop %v2152
        %v2223 = vmul.f32 %v2152, %v2222
        %v2224 = vsub.f32 1.0, %v2223
        %v2225 = vmul.f32 %v2222, %v2224
        %v2226 = vadd.f32 %v2222, %v2225
        %vm2227 = vweird.f32 %v2152
        %vm2228 = vweird.f32 %v2222
        %vm2229 = vmor %vm2227, %vm2228
        %v2230 = vsel %vm2229, %v2222, %v2226
        %v2231 = vand.u32 2147483647, %v2152
        %vm2232 = vcmp.eq.f32.partialorder %v2231, 8.507059e+37
        %v2233 = vand.u32 %v2152, 2147483648
        %v2234 = vor.u32 1.1754944e-38, %v2233
        %v2235 = vsel %vm2232, %v2234, %v2230
        %v2236 = vmul.f32 1.0, %v2235
        %v2237 = vrcp.pop %v2155
        %v2238 = vmul.f32 %v2155, %v2237
        %v2239 = vsub.f32 1.0, %v2238
        %v2240 = vmul.f32 %v2237, %v2239
        %v2241 = vadd.f32 %v2237, %v2240
        %vm2242 = vweird.f32 %v2155
        %vm2243 = vweird.f32 %v2237
        %vm2244 = vmor %vm2242, %vm2243
        %v2245 = vsel %vm2244, %v2237, %v2241
        %v2246 = vand.u32 2147483647, %v2155
        %vm2247 = vcmp.eq.f32.partialorder %v2246, 8.507059e+37
        %v2248 = vand.u32 %v2155, 2147483648
        %v2249 = vor.u32 1.1754944e-38, %v2248
        %v2250 = vsel %vm2247, %v2249, %v2245
        %v2251 = vmul.f32 1.0, %v2250
        %v2252 = vrcp.pop %v2158
        %v2253 = vmul.f32 %v2158, %v2252
        %v2254 = vsub.f32 1.0, %v2253
        %v2255 = vmul.f32 %v2252, %v2254
        %v2256 = vadd.f32 %v2252, %v2255
        %vm2257 = vweird.f32 %v2158
        %vm2258 = vweird.f32 %v2252
        %vm2259 = vmor %vm2257, %vm2258
        %v2260 = vsel %vm2259, %v2252, %v2256
        %v2261 = vand.u32 2147483647, %v2158
        %vm2262 = vcmp.eq.f32.partialorder %v2261, 8.507059e+37
        %v2263 = vand.u32 %v2158, 2147483648
        %v2264 = vor.u32 1.1754944e-38, %v2263
        %v2265 = vsel %vm2262, %v2264, %v2260
        %v2266 = vmul.f32 1.0, %v2265
        %v2267 = vrcp.pop %v2161
        %v2268 = vmul.f32 %v2161, %v2267
        %v2269 = vsub.f32 1.0, %v2268
        %v2270 = vmul.f32 %v2267, %v2269
        %v2271 = vadd.f32 %v2267, %v2270
        %vm2272 = vweird.f32 %v2161
        %vm2273 = vweird.f32 %v2267
        %vm2274 = vmor %vm2272, %vm2273
        %v2275 = vsel %vm2274, %v2267, %v2271
        %v2276 = vand.u32 2147483647, %v2161
        %vm2277 = vcmp.eq.f32.partialorder %v2276, 8.507059e+37
        %v2278 = vand.u32 %v2161, 2147483648
        %v2279 = vor.u32 1.1754944e-38, %v2278
        %v2280 = vsel %vm2277, %v2279, %v2275
        %v2281 = vmul.f32 1.0, %v2280
        %v2282 = vmul.f32 %v2123, %v2176
        %v2283 = vmul.f32 %v2125, %v2191
        %v2284 = vmul.f32 %v2127, %v2206
        %v2285 = vmul.f32 %v2129, %v2221
        %v2286 = vmul.f32 %v2131, %v2236
        %v2287 = vmul.f32 %v2133, %v2251
        %v2288 = vmul.f32 %v2135, %v2266
        %v2289 = vmul.f32 %v2137, %v2281
        %v2291 = vsel %vm1680, %v2282, 0
        %v2294 = vsel %vm1680, %v2283, 0
        %v2297 = vsel %vm1680, %v2284, 0
        %v2300 = vsel %vm1680, %v2285, 0
        %v2303 = vsel %vm1680, %v2286, 0
        %v2306 = vsel %vm1680, %v2287, 0
        %v2309 = vsel %vm1680, %v2288, 0
        %v2312 = vsel %vm1680, %v2289, 0
        %2314 = vmatpush.msra.mxu0 0.0
        %2315 = vmatpush.msra.mxu0 0.0
        %2316 = vmatpush.msra.mxu0 0.0
        %2317 = vmatpush.msra.mxu0 0.0
        %2318 = vmatpush.msra.mxu0 0.0
        %2319 = vmatpush.msra.mxu0 0.0
        %2320 = vmatpush.msra.mxu0 0.0
        %2321 = vmatpush.msra.mxu0 %v1474
        %2322 = vmatpush.msra.mxu0 %v1472
        %2323 = vmatpush.msra.mxu0 %v1470
        %2324 = vmatpush.msra.mxu0 %v1468
        %2325 = vmatpush.msra.mxu0 %v1466
        %2326 = vmatpush.msra.mxu0 %v1464
        %2327 = vmatpush.msra.mxu0 %v1462
        %2328 = vmatpush.msra.mxu0 %v1460
        %2329 = vmatpush.msra.mxu0 %v1595
        %2330 = vmatmul.f32.gmra.mxu0 %v2291
        %v2331 = vpop.f32.mrf.mxu0
        %v2332 = vadd.f32 0.0, %v2331
        %2333 = vmatmul.f32.gmra.mxu0 %v2294
        %v2334 = vpop.f32.mrf.mxu0
        %v2335 = vadd.f32 0.0, %v2334
        %2336 = vmatmul.f32.gmra.mxu0 %v2297
        %v2337 = vpop.f32.mrf.mxu0
        %v2338 = vadd.f32 0.0, %v2337
        %2339 = vmatmul.f32.gmra.mxu0 %v2300
        %v2340 = vpop.f32.mrf.mxu0
        %v2341 = vadd.f32 0.0, %v2340
        %2342 = vmatmul.f32.gmra.mxu0 %v2303
        %v2343 = vpop.f32.mrf.mxu0
        %v2344 = vadd.f32 0.0, %v2343
        %2345 = vmatmul.f32.gmra.mxu0 %v2306
        %v2346 = vpop.f32.mrf.mxu0
        %v2347 = vadd.f32 0.0, %v2346
        %2348 = vmatmul.f32.gmra.mxu0 %v2309
        %v2349 = vpop.f32.mrf.mxu0
        %v2350 = vadd.f32 0.0, %v2349
        %2351 = vmatmul.f32.gmra.mxu0 %v2312
        %v2352 = vpop.f32.mrf.mxu0
        %v2353 = vadd.f32 0.0, %v2352
        %2354 = vdwg.mxu0
        %v2355 = vmul.f32 %v2332, %v1949
        %v2356 = vmul.f32 %v2335, %v1954
        %v2357 = vmul.f32 %v2338, %v1959
        %v2358 = vmul.f32 %v2341, %v1964
        %v2359 = vmul.f32 %v2344, %v1969
        %v2360 = vmul.f32 %v2347, %v1974
        %v2361 = vmul.f32 %v2350, %v1979
        %v2362 = vmul.f32 %v2353, %v1984
        %v2363 = vld [vmem:[%s9 + $0x20] sm:$0xff]
        %v2364 = vld [vmem:[%s9 + $0x28] sm:$0xff]
        %v2365 = vld [vmem:[%s9 + $0x30] sm:$0xff]
        %v2366 = vld [vmem:[%s9 + $0x38] sm:$0xff]
        %v2368 = vsel %vm1505, %v2355, 0
        %v2371 = vsel %vm1505, %v2356, 0
        %v2374 = vsel %vm1505, %v2357, 0
        %v2377 = vsel %vm1505, %v2358, 0
        %v2380 = vsel %vm1505, %v2359, 0
        %v2383 = vsel %vm1505, %v2360, 0
        %v2386 = vsel %vm1505, %v2361, 0
        %v2389 = vsel %vm1505, %v2362, 0
        %2391 = vmatpush.msra.mxu0 0.0
        %2392 = vmatpush.msra.mxu0 0.0
        %2393 = vmatpush.msra.mxu0 0.0
        %2394 = vmatpush.msra.mxu0 0.0
        %2395 = vmatpush.msra.mxu0 0.0
        %2396 = vmatpush.msra.mxu0 0.0
        %2397 = vmatpush.msra.mxu0 0.0
        %2398 = vmatpush.msra.mxu0 0.0
        %2399 = vmatpush.msra.mxu0 0.0
        %2400 = vmatpush.msra.mxu0 0.0
        %2401 = vmatpush.msra.mxu0 0.0
        %2402 = vmatpush.msra.mxu0 0.0
        %2403 = vmatpush.msra.mxu0 %v2366
        %2404 = vmatpush.msra.mxu0 %v2365
        %2405 = vmatpush.msra.mxu0 %v2364
        %2406 = vmatpush.msra.mxu0 %v2363
        %2407 = vmatmul.f32.gmra.mxu0 %v2368
        %v2408 = vpop.f32.mrf.mxu0
        %v2409 = vadd.f32 0.0, %v2408
        %2410 = vmatmul.f32.gmra.mxu0 %v2371
        %v2411 = vpop.f32.mrf.mxu0
        %v2412 = vadd.f32 0.0, %v2411
        %2413 = vmatmul.f32.gmra.mxu0 %v2374
        %v2414 = vpop.f32.mrf.mxu0
        %v2415 = vadd.f32 0.0, %v2414
        %2416 = vmatmul.f32.gmra.mxu0 %v2377
        %v2417 = vpop.f32.mrf.mxu0
        %v2418 = vadd.f32 0.0, %v2417
        %2419 = vmatmul.f32.gmra.mxu0 %v2380
        %v2420 = vpop.f32.mrf.mxu0
        %v2421 = vadd.f32 0.0, %v2420
        %2422 = vmatmul.f32.gmra.mxu0 %v2383
        %v2423 = vpop.f32.mrf.mxu0
        %v2424 = vadd.f32 0.0, %v2423
        %2425 = vmatmul.f32.gmra.mxu0 %v2386
        %v2426 = vpop.f32.mrf.mxu0
        %v2427 = vadd.f32 0.0, %v2426
        %2428 = vmatmul.f32.gmra.mxu0 %v2389
        %v2429 = vpop.f32.mrf.mxu0
        %v2430 = vadd.f32 0.0, %v2429
        %2431 = vdwg.mxu0
        %v2433 = vsel %vm1505, %v1986, 0
        %v2436 = vsel %vm1505, %v1987, 0
        %v2439 = vsel %vm1505, %v1988, 0
        %v2442 = vsel %vm1505, %v1989, 0
        %v2445 = vsel %vm1505, %v1990, 0
        %v2448 = vsel %vm1505, %v1991, 0
        %v2451 = vsel %vm1505, %v1992, 0
        %v2454 = vsel %vm1505, %v1993, 0
        %2456 = vmatpush.msra.mxu0 0.0
        %2457 = vmatpush.msra.mxu0 0.0
        %2458 = vmatpush.msra.mxu0 0.0
        %2459 = vmatpush.msra.mxu0 0.0
        %2460 = vmatpush.msra.mxu0 0.0
        %2461 = vmatpush.msra.mxu0 0.0
        %2462 = vmatpush.msra.mxu0 0.0
        %2463 = vmatpush.msra.mxu0 0.0
        %2464 = vmatpush.msra.mxu0 0.0
        %2465 = vmatpush.msra.mxu0 0.0
        %2466 = vmatpush.msra.mxu0 0.0
        %2467 = vmatpush.msra.mxu0 0.0
        %2468 = vmatpush.msra.mxu0 %v1997
        %2469 = vmatpush.msra.mxu0 %v1996
        %2470 = vmatpush.msra.mxu0 %v1995
        %2471 = vmatpush.msra.mxu0 %v1994
        %2472 = vmatmul.f32.gmra.mxu0 %v2433
        %v2473 = vpop.f32.mrf.mxu0
        %v2474 = vadd.f32 %v2409, %v2473
        %2475 = vmatmul.f32.gmra.mxu0 %v2436
        %v2476 = vpop.f32.mrf.mxu0
        %v2477 = vadd.f32 %v2412, %v2476
        %2478 = vmatmul.f32.gmra.mxu0 %v2439
        %v2479 = vpop.f32.mrf.mxu0
        %v2480 = vadd.f32 %v2415, %v2479
        %2481 = vmatmul.f32.gmra.mxu0 %v2442
        %v2482 = vpop.f32.mrf.mxu0
        %v2483 = vadd.f32 %v2418, %v2482
        %2484 = vmatmul.f32.gmra.mxu0 %v2445
        %v2485 = vpop.f32.mrf.mxu0
        %v2486 = vadd.f32 %v2421, %v2485
        %2487 = vmatmul.f32.gmra.mxu0 %v2448
        %v2488 = vpop.f32.mrf.mxu0
        %v2489 = vadd.f32 %v2424, %v2488
        %2490 = vmatmul.f32.gmra.mxu0 %v2451
        %v2491 = vpop.f32.mrf.mxu0
        %v2492 = vadd.f32 %v2427, %v2491
        %2493 = vmatmul.f32.gmra.mxu0 %v2454
        %v2494 = vpop.f32.mrf.mxu0
        %v2495 = vadd.f32 %v2430, %v2494
        %2496 = vdwg.mxu0
        %v2497 = vld [vmem:[%s10] sm:$0x1]
        %v2499 = vperm.slane %v2497, 0
        %v2501 = vadd.f32 %v2474, %v2499
        %v2502 = vadd.f32 %v2477, %v2499
        %v2503 = vadd.f32 %v2480, %v2499
        %v2504 = vadd.f32 %v2483, %v2499
        %v2505 = vadd.f32 %v2486, %v2499
        %v2506 = vadd.f32 %v2489, %v2499
        %v2507 = vadd.f32 %v2492, %v2499
        %v2508 = vadd.f32 %v2495, %v2499
        %2509 = vst.msk [vmem:[%s409] sm:$0xff] %vm471, %v2501
        %2510 = vst.msk [vmem:[%s409 + $0x8] sm:$0xff] %vm471, %v2502
        %2511 = vst.msk [vmem:[%s409 + $0x10] sm:$0xff] %vm471, %v2503
        %2512 = vst.msk [vmem:[%s409 + $0x18] sm:$0xff] %vm471, %v2504
        %2513 = vst.msk [vmem:[%s409 + $0x20] sm:$0xff] %vm471, %v2505
        %2514 = vst.msk [vmem:[%s409 + $0x28] sm:$0xff] %vm471, %v2506
        %2515 = vst.msk [vmem:[%s409 + $0x30] sm:$0xff] %vm471, %v2507
        %2516 = vst.msk [vmem:[%s409 + $0x38] sm:$0xff] %vm471, %v2508
        %s2517 = sand.u32 %s279, 1
        %s2518 = scalar_lea.sflag [#allocation3], %s2517
        %s2519 = sand.u32 %s279, 1
        %s2520 = smul.addr %s2519, 64
        %s2521 = scalar_lea.vmem [#allocation2], %s2520
        // Predicated region
        $region65: #{attention_sketch_forward.1} parent=63 // pred_check
          %p2522 = pneg %p289
        $region66: #{attention_sketch_forward.1} parent=63 // pred_check_branch
          %2524 = sbr.rel (%p2522) target = $region68
        $region67: #{attention_sketch_forward.1} parent=63 // pred_region
          %2526 = vsyncadd %s2518, 0
          %s2527 = smul.addr %s25, 8
          %s2528 = smul.addr %s2527, 8
          %s2529 = scalar_lea.hbm %s11, %s2528
          %s2530 = sshll.u32 %s2521, 4
          %s2531 = int_to_ptr.vmem [resolvable:$true] %s2530
          %s2532 = sshll.u32 %s2529, 4
          %s2533 = int_to_ptr.hbm [resolvable:$true] %s2532
          %2538 = dma.vmem_to_hbm [thread:$0]  %s2531, 1024, %s2533, %s2518, 128, 128, 8
        $region68: #{attention_sketch_forward.1} parent=63 // pred_fallthru
          _
      $region64: #{attention_sketch_forward.1} parent=5 // pred_fallthru
        _
      %p2539 = scmp.le.s32.totalorder 2, %s20
      // Predicated region
      $region69: #{attention_sketch_forward.1} parent=5 // pred_check
        %p2540 = pneg %p2539
      $region70: #{attention_sketch_forward.1} parent=5 // pred_check_branch
        %2542 = sbr.rel (%p2540) target = $region72
      $region71: #{attention_sketch_forward.1} parent=5 // pred_region
        %s2543 = ssub.s32 %s20, 2
        // Predicated region
        $region73: #{attention_sketch_forward.1} parent=71 // pred_check
          %p2544 = pneg %p295
        $region74: #{attention_sketch_forward.1} parent=71 // pred_check_branch
          %2546 = sbr.rel (%p2544) target = $region76
        $region75: #{attention_sketch_forward.1} parent=71 // pred_region
          %s2547 = sand.u32 %s280, 1
          %s2548 = scalar_lea.sflag [#allocation3], %s2547
          %s2549 = sand.u32 %s280, 1
          %s2550 = smul.addr %s2549, 64
          %s2551 = scalar_lea.vmem [#allocation2], %s2550
          %2553 = dma.done %s2548, 1024
        $region76: #{attention_sketch_forward.1} parent=71 // pred_fallthru
          _
      $region72: #{attention_sketch_forward.1} parent=5 // pred_fallthru
        _
    $region6: #{attention_sketch_forward.1} parent=1 // loop_footer
      %s24 = sadd.s32 1, %s20
    $region7: #{attention_sketch_forward.1} parent=1 // loop_footer_branch
      %19 = sbr.rel target = $region3
    $region8: #{attention_sketch_forward.1} parent=1 // loop_exit
      _
    %2554 = vsyncpa [#allocation3], 1
    %s2555 = scalar_lea.sflag [#allocation3], 1
    %2556 = vsyncpa %s2555, 1

</llo_original>
